<compile_context>
chip_gen: v7x
topology: tpu7x:2x2x1
jax: 0.10.0
libtpu: 0.0.40
codegen_flags: <defaults>
</compile_context>

<pallas_src>
import jax
import jax.numpy as jnp
from jax.experimental import pallas as pl
from jax.experimental.pallas import tpu as pltpu


def rpn_kernel(p_ref, w1_ref, b1_ref, wh_ref, bh_ref, out_ref, acc_ref):
    """Fused RPN head on one (row-tile, K-chunk) grid cell.

    p_ref:   (tm, tk)          bf16 im2col patch chunk
    w1_ref:  (tk, Cmid_p)      bf16 3x3-conv GEMM weight chunk
    b1_ref:  (1, Cmid_p)       f32 bias
    wh_ref:  (Cmid_p, Cout_p)  bf16 fused [score | bbox] 1x1-head weight
    bh_ref:  (1, Cout_p)       f32 fused head bias
    out_ref: (tm, Cout_p)      f32 lane-dense fused output slab
    acc_ref: (tm, Cmid_p)      f32 accumulator scratch (hidden pre-activation)
    """
    k = pl.program_id(1)

    @pl.when(k == 0)
    def _():
        acc_ref[...] = jnp.zeros_like(acc_ref)

    # 3x3 conv as im2col GEMM, accumulated over K chunks in f32 on the MXU.
    acc_ref[...] += jnp.dot(p_ref[...], w1_ref[...],
                            preferred_element_type=jnp.float32)

    @pl.when(k == pl.num_programs(1) - 1)
    def _():
        hidden = jnp.maximum(acc_ref[...] + b1_ref[...], 0.0)       # bias + ReLU
        hidden = hidden.astype(wh_ref.dtype)                        # bf16 -> MXU
        out = jnp.dot(hidden, wh_ref[...],
                      preferred_element_type=jnp.float32) + bh_ref[...]
        out_ref[...] = out.astype(out_ref.dtype)


def _round_up(x, m):
    return ((x + m - 1) // m) * m


def _chip_config():
    """Per-generation (num parallel TCs, VMEM byte budget, scoped-VMEM cap)."""
    try:
        kind = jax.devices()[0].device_kind.lower()
    except Exception:
        kind = ""
    if "v7" in kind:
        # 2 TensorCores per chip, 64 MiB VMEM per TC.
        return 2, 32 << 20, 48 << 20
    if "v5" in kind:
        # v5e: 128 MiB physical, but default scoped VMEM is small -> stay modest.
        return 1, 48 << 20, 96 << 20
    # v6e / default single-TC chips, 128 MiB physical VMEM.
    return 1, 64 << 20, 100 << 20


def _pick_tk(k9_p):
    """Contraction chunk: <=512, multiple of 128, divides the padded K dim."""
    if k9_p <= 512:
        return k9_p
    for cand in (512, 384, 256, 128):
        if k9_p % cand == 0:
            return cand
    return 128


def _row_tiling(rows, tk, cmid_p, cout_p, budget, num_cores):
    """Derive (tm, blocks) from a VMEM byte budget; tm capped at 2048 rows."""
    bytes_per_row = (
        2 * tk * 2          # patch chunk, double-buffered bf16
        + 2 * cout_p * 4    # output tile, double-buffered f32
        + cmid_p * 4        # f32 accumulator scratch
        + cmid_p * 2        # bf16 hidden temp
        + cout_p * 4        # f32 pre-store temp
    )
    fixed = (
        2 * tk * cmid_p * 2        # w1 chunk, double-buffered bf16
        + 2 * cmid_p * cout_p * 2  # fused head weight, double-buffered bf16
        + 2 * (cmid_p + cout_p) * 4
    )
    tm_cap = max(8, (budget - fixed) // bytes_per_row)
    tm_cap = min(tm_cap, 2048)                    # HBM-roofline sweet spot
    tm_cap = max(8, (tm_cap // 8) * 8)
    blocks = max(num_cores, pl.cdiv(rows, tm_cap))
    blocks = _round_up(blocks, num_cores)         # even split across TCs (v7x)
    tm = _round_up(pl.cdiv(rows, blocks), 8)
    vmem_est = tm * bytes_per_row + fixed
    return tm, blocks, vmem_est


def rpn_forward(features_nchw, params):
    """features_nchw: (N, Cin, H, W) float32 -> (scores NCHW, bboxes NCHW)."""
    w1, b1, ws, bs, wb, bb = params
    N, Cin, H, W = features_nchw.shape
    Cmid = w1.shape[-1]
    A2 = ws.shape[-1]
    A4 = wb.shape[-1]
    Cout = A2 + A4

    LANE = 128
    Cmid_p = _round_up(Cmid, LANE)
    Cout_p = _round_up(Cout, LANE)
    K9 = 9 * Cin
    K9_p = _round_up(K9, LANE)          # unmasked loads / clean MXU cadence
    tk = _pick_tk(K9_p)
    k_blocks = K9_p // tk

    rows = N * H * W
    num_cores, budget, vmem_cap = _chip_config()
    tm, blocks, vmem_est = _row_tiling(rows, tk, Cmid_p, Cout_p, budget, num_cores)
    rows_p = tm * blocks
    vmem_limit = int(min(vmem_cap, max(vmem_est + vmem_est // 4 + (2 << 20),
                                       32 << 20)))

    # NCHW -> NHWC and im2col for the 3x3 same-padded conv: (rows, 9*Cin).
    x = jnp.transpose(features_nchw, (0, 2, 3, 1))
    xp = jnp.pad(x, ((0, 0), (1, 1), (1, 1), (0, 0)))
    taps = [xp[:, ky:ky + H, kx:kx + W, :] for ky in range(3) for kx in range(3)]
    patches = jnp.concatenate(taps, axis=-1).reshape(rows, K9)
    patches = jnp.pad(patches.astype(jnp.bfloat16),
                      ((0, rows_p - rows), (0, K9_p - K9)))

    # 3x3 HWIO weights -> single GEMM weight; zero-pad K9/Cmid; cast to bf16.
    w1_mat = jnp.pad(w1.reshape(K9, Cmid),
                     ((0, K9_p - K9), (0, Cmid_p - Cmid))).astype(jnp.bfloat16)
    b1_row = jnp.pad(b1.reshape(1, Cmid), ((0, 0), (0, Cmid_p - Cmid)))

    # Fuse score + bbox 1x1 heads into one lane-dense (Cmid_p, 128) GEMM.
    wh = jnp.concatenate([ws, wb], axis=1)                         # (Cmid, Cout)
    wh = jnp.pad(wh, ((0, Cmid_p - Cmid), (0, Cout_p - Cout))).astype(jnp.bfloat16)
    bh = jnp.pad(jnp.concatenate([bs, bb], axis=1).reshape(1, Cout),
                 ((0, 0), (0, Cout_p - Cout)))

    out = pl.pallas_call(
        rpn_kernel,
        out_shape=jax.ShapeDtypeStruct((rows_p, Cout_p), jnp.float32),
        grid_spec=pltpu.PrefetchScalarGridSpec(
            num_scalar_prefetch=0,
            grid=(blocks, k_blocks),
            in_specs=[
                pl.BlockSpec((tm, tk), lambda i, k: (i, k)),
                pl.BlockSpec((tk, Cmid_p), lambda i, k: (k, 0)),
                pl.BlockSpec((1, Cmid_p), lambda i, k: (0, 0)),
                pl.BlockSpec((Cmid_p, Cout_p), lambda i, k: (0, 0)),
                pl.BlockSpec((1, Cout_p), lambda i, k: (0, 0)),
            ],
            out_specs=pl.BlockSpec((tm, Cout_p), lambda i, k: (i, 0)),
            scratch_shapes=[pltpu.VMEM((tm, Cmid_p), jnp.float32)],
        ),
        compiler_params=pltpu.CompilerParams(
            dimension_semantics=("parallel", "arbitrary"),
            vmem_limit_bytes=vmem_limit),
    )(patches, w1_mat, b1_row, wh, bh)

    # Slice off row/lane padding and split back into the two heads (NCHW).
    out = out[:rows, :Cout].reshape(N, H, W, Cout)
    scores = jnp.transpose(out[..., :A2], (0, 3, 1, 2))
    bbox = jnp.transpose(out[..., A2:], (0, 3, 1, 2))
    return scores, bbox


def init_rpn_params(key, cin, cmid, num_base_anchors):
    """weights_normal_init: weights ~ N(0, dev), biases = 0 (deterministic via key)."""
    k1, k2, k3 = jax.random.split(key, 3)
    a2 = num_base_anchors * 2
    a4 = num_base_anchors * 4
    # PyTorch OIHW weights, then converted to the kernel's layouts.
    w1_oihw = jax.random.normal(k1, (cmid, cin, 3, 3), jnp.float32) * 0.01
    ws_oihw = jax.random.normal(k2, (a2, cmid, 1, 1), jnp.float32) * 0.01
    wb_oihw = jax.random.normal(k3, (a4, cmid, 1, 1), jnp.float32) * 0.001

    w1 = jnp.transpose(w1_oihw, (2, 3, 1, 0))            # (3, 3, Cin, Cmid) HWIO
    ws = jnp.transpose(ws_oihw[:, :, 0, 0], (1, 0))      # (Cmid, A2)
    wb = jnp.transpose(wb_oihw[:, :, 0, 0], (1, 0))      # (Cmid, A4)
    b1 = jnp.zeros((1, cmid), jnp.float32)
    bs = jnp.zeros((1, a2), jnp.float32)
    bb = jnp.zeros((1, a4), jnp.float32)
    return (w1, b1, ws, bs, wb, bb), (w1_oihw, ws_oihw, wb_oihw)


def rpn_reference(features_nchw, torch_weights):
    """Pure-JAX (lax.conv) f32 reference of the PyTorch forward, for validation."""
    w1_oihw, ws_oihw, wb_oihw = torch_weights
    dn = ("NCHW", "OIHW", "NCHW")
    hidden = jax.lax.conv_general_dilated(
        features_nchw, w1_oihw, (1, 1), "SAME", dimension_numbers=dn)
    hidden = jnp.maximum(hidden, 0.0)
    scores = jax.lax.conv_general_dilated(
        hidden, ws_oihw, (1, 1), "VALID", dimension_numbers=dn)
    bbox = jax.lax.conv_general_dilated(
        hidden, wb_oihw, (1, 1), "VALID", dimension_numbers=dn)
    return scores, bbox


if __name__ == "__main__":
    # Small config: FEATURE_CHANNELS=4, MID_CHANNELS=16, 3 anchor scales -> 9 base anchors.
    N, Cin, H, W = 2, 4, 16, 16
    Cmid = 16
    num_base_anchors = 3 ** 2

    key = jax.random.PRNGKey(0)
    k_x, k_w = jax.random.split(key)
    features = jax.random.normal(k_x, (N, Cin, H, W), jnp.float32)

    params, torch_weights = init_rpn_params(k_w, Cin, Cmid, num_base_anchors)

    scores, bbox = rpn_forward(features, params)
    jax.block_until_ready((scores, bbox))

    assert scores.shape == (N, num_base_anchors * 2, H, W)
    assert bbox.shape == (N, num_base_anchors * 4, H, W)

    # bf16 patch/weight casts -> loosened tolerance vs the f32 reference.
    ref_scores, ref_bbox = rpn_reference(features, torch_weights)
    assert jnp.allclose(scores, ref_scores, atol=2e-3, rtol=2e-2)
    assert jnp.allclose(bbox, ref_bbox, atol=2e-3, rtol=2e-2)

    print("KERNEL_OK")
</pallas_src>

<mosaic_0001>
module attributes {stable_mosaic.version = 11 : i64} {
  func.func @rpn_kernel(%arg0: i32, %arg1: i32, %arg2: memref<512x128xbf16, #tpu.memory_space<vmem>>, %arg3: memref<128x128xbf16, #tpu.memory_space<vmem>>, %arg4: memref<1x128xf32, #tpu.memory_space<vmem>>, %arg5: memref<128x128xbf16, #tpu.memory_space<vmem>>, %arg6: memref<1x128xf32, #tpu.memory_space<vmem>>, %arg7: memref<512x128xf32, #tpu.memory_space<vmem>>, %arg8: memref<512x128xf32, #tpu.memory_space<vmem>>) attributes {dimension_semantics = [#tpu.dimension_semantics<parallel>, #tpu.dimension_semantics<arbitrary>], iteration_bounds = array<i64: 1, 1>, scalar_prefetch = 0 : i64, scratch_operands = 1 : i64, tpu.core_type = #tpu.core_type<tc>, window_params = [{transform_indices = @transform_0, window_bounds = array<i64: 512, 128>}, {transform_indices = @transform_1, window_bounds = array<i64: 128, 128>}, {pipeline_mode = #tpu.pipeline_mode<synchronous>, transform_indices = @transform_2, window_bounds = array<i64: 1, 128>}, {pipeline_mode = #tpu.pipeline_mode<synchronous>, transform_indices = @transform_3, window_bounds = array<i64: 128, 128>}, {pipeline_mode = #tpu.pipeline_mode<synchronous>, transform_indices = @transform_4, window_bounds = array<i64: 1, 128>}, {transform_indices = @transform_5, window_bounds = array<i64: 512, 128>}]} {
    %c0_i32 = arith.constant 0 : i32
    %0 = arith.cmpi eq, %arg1, %c0_i32 : i32
    %1 = arith.extui %0 : i1 to i32
    %c0_i32_0 = arith.constant 0 : i32
    %2 = arith.cmpi ne, %1, %c0_i32_0 : i32
    scf.if %2 {
      %cst_10 = arith.constant 0.000000e+00 : f32
      %12 = vector.broadcast %cst_10 : f32 to vector<512x128xf32>
      %c0_11 = arith.constant 0 : index
      %c0_12 = arith.constant 0 : index
      %13 = vector.load %arg8[%c0_11, %c0_12] : memref<512x128xf32, #tpu.memory_space<vmem>>, vector<512x128xf32>
      tpu.vector_store %arg8[%c0_11, %c0_12], %12 {strides = array<i32>} : memref<512x128xf32, #tpu.memory_space<vmem>>, vector<512x128xf32>,
    } else {
    }
    %c0 = arith.constant 0 : index
    %c0_1 = arith.constant 0 : index
    %3 = vector.load %arg8[%c0, %c0_1] : memref<512x128xf32, #tpu.memory_space<vmem>>, vector<512x128xf32>
    %c0_2 = arith.constant 0 : index
    %c0_3 = arith.constant 0 : index
    %4 = vector.load %arg2[%c0_2, %c0_3] : memref<512x128xbf16, #tpu.memory_space<vmem>>, vector<512x128xbf16>
    %c0_4 = arith.constant 0 : index
    %c0_5 = arith.constant 0 : index
    %5 = vector.load %arg3[%c0_4, %c0_5] : memref<128x128xbf16, #tpu.memory_space<vmem>>, vector<128x128xbf16>
    %cst = arith.constant dense<0.000000e+00> : vector<512x128xf32>
    %6 = tpu.matmul %4, %5, %cst {dimension_numbers = #tpu.dot_dimension_numbers<[1], [0], [0], [1], [0, 0, 1, 1], [], []>} : vector<512x128xbf16>, vector<128x128xbf16>, vector<512x128xf32> -> vector<512x128xf32>
    %7 = arith.addf %3, %6 : vector<512x128xf32>
    %c0_6 = arith.constant 0 : index
    %c0_7 = arith.constant 0 : index
    %8 = vector.load %arg8[%c0_6, %c0_7] : memref<512x128xf32, #tpu.memory_space<vmem>>, vector<512x128xf32>
    tpu.vector_store %arg8[%c0_6, %c0_7], %7 {strides = array<i32>} : memref<512x128xf32, #tpu.memory_space<vmem>>, vector<512x128xf32>,
    %c0_i32_8 = arith.constant 0 : i32
    %9 = arith.cmpi eq, %arg1, %c0_i32_8 : i32
    %10 = arith.extui %9 : i1 to i32
    %c0_i32_9 = arith.constant 0 : i32
    %11 = arith.cmpi ne, %10, %c0_i32_9 : i32
    scf.if %11 {
      %c0_10 = arith.constant 0 : index
      %c0_11 = arith.constant 0 : index
      %12 = vector.load %arg8[%c0_10, %c0_11] : memref<512x128xf32, #tpu.memory_space<vmem>>, vector<512x128xf32>
      %c0_12 = arith.constant 0 : index
      %c0_13 = arith.constant 0 : index
      %13 = vector.load %arg4[%c0_12, %c0_13] : memref<1x128xf32, #tpu.memory_space<vmem>>, vector<1x128xf32>
      %14 = vector.broadcast %13 : vector<1x128xf32> to vector<512x128xf32>
      %15 = arith.addf %12, %14 : vector<512x128xf32>
      %cst_14 = arith.constant 0.000000e+00 : f32
      %16 = vector.broadcast %cst_14 : f32 to vector<512x128xf32>
      %17 = arith.maximumf %15, %16 : vector<512x128xf32>
      %18 = arith.truncf %17 : vector<512x128xf32> to vector<512x128xbf16>
      %c0_15 = arith.constant 0 : index
      %c0_16 = arith.constant 0 : index
      %19 = vector.load %arg5[%c0_15, %c0_16] : memref<128x128xbf16, #tpu.memory_space<vmem>>, vector<128x128xbf16>
      %cst_17 = arith.constant dense<0.000000e+00> : vector<512x128xf32>
      %20 = tpu.matmul %18, %19, %cst_17 {dimension_numbers = #tpu.dot_dimension_numbers<[1], [0], [0], [1], [0, 0, 1, 1], [], []>} : vector<512x128xbf16>, vector<128x128xbf16>, vector<512x128xf32> -> vector<512x128xf32>
      %c0_18 = arith.constant 0 : index
      %c0_19 = arith.constant 0 : index
      %21 = vector.load %arg6[%c0_18, %c0_19] : memref<1x128xf32, #tpu.memory_space<vmem>>, vector<1x128xf32>
      %22 = vector.broadcast %21 : vector<1x128xf32> to vector<512x128xf32>
      %23 = arith.addf %20, %22 : vector<512x128xf32>
      %c0_20 = arith.constant 0 : index
      %c0_21 = arith.constant 0 : index
      %24 = vector.load %arg7[%c0_20, %c0_21] : memref<512x128xf32, #tpu.memory_space<vmem>>, vector<512x128xf32>
      tpu.vector_store %arg7[%c0_20, %c0_21], %23 {strides = array<i32>} : memref<512x128xf32, #tpu.memory_space<vmem>>, vector<512x128xf32>,
    } else {
    }
    return
  }
  func.func @transform_0(%arg0: i32, %arg1: i32) -> (i32, i32) {
    %c0_i32 = arith.constant 0 : i32
    return %arg0, %arg1 : i32, i32
  }
  func.func @transform_1(%arg0: i32, %arg1: i32) -> (i32, i32) {
    %c0_i32 = arith.constant 0 : i32
    %c0_i32_0 = arith.constant 0 : i32
    return %arg1, %c0_i32 : i32, i32
  }
  func.func @transform_2(%arg0: i32, %arg1: i32) -> (i32, i32) {
    %c0_i32 = arith.constant 0 : i32
    %c0_i32_0 = arith.constant 0 : i32
    %c0_i32_1 = arith.constant 0 : i32
    return %c0_i32, %c0_i32_0 : i32, i32
  }
  func.func @transform_3(%arg0: i32, %arg1: i32) -> (i32, i32) {
    %c0_i32 = arith.constant 0 : i32
    %c0_i32_0 = arith.constant 0 : i32
    %c0_i32_1 = arith.constant 0 : i32
    return %c0_i32, %c0_i32_0 : i32, i32
  }
  func.func @transform_4(%arg0: i32, %arg1: i32) -> (i32, i32) {
    %c0_i32 = arith.constant 0 : i32
    %c0_i32_0 = arith.constant 0 : i32
    %c0_i32_1 = arith.constant 0 : i32
    return %c0_i32, %c0_i32_0 : i32, i32
  }
  func.func @transform_5(%arg0: i32, %arg1: i32) -> (i32, i32) {
    %c0_i32 = arith.constant 0 : i32
    %c0_i32_0 = arith.constant 0 : i32
    return %arg0, %c0_i32 : i32, i32
  }
}

</mosaic_0001>

<llo_original>
// kernel: tpu_custom_call.1
$region0: #{tpu_custom_call.1}
  #allocation0 [shape = 'u32[]', space=smem, size = 0x4, offset = 0x4, fixed_abs, tag = 'smem constant byte address 0x4 - core index']
  #allocation1 [shape = 'u32[144,128]{1,0:T(1,128)}', space=vmem, size = 0x12000, scoped, tag = 'internal scratch']
  #allocation2 [shape = 'f32[512,128]{1,0:T(8,128)}', space=vmem, size = 0x40000, scoped, tag = 'scratch operand']
  %s0 = inlined_call_operand.hbm [shape: bf16[512,128], index: 0, kind: input, shape index: {}]
  %s1 = inlined_call_operand.hbm [shape: bf16[128,128], index: 1, kind: input, shape index: {}]
  %s2 = inlined_call_operand.vmem [shape: f32[1,128], index: 2, kind: input, shape index: {}]
  %s3 = inlined_call_operand.hbm [shape: bf16[128,128], index: 3, kind: input, shape index: {}]
  %s4 = inlined_call_operand.vmem [shape: f32[1,128], index: 4, kind: input, shape index: {}]
  %s5 = inlined_call_operand.hbm [shape: f32[512,128], index: 5, kind: output, shape index: {}]
  %s6 = sld [smem:[#allocation0]]
  $region50: #{tpu_custom_call.1} parent=0
    _
  %s8 = ssub.s32 1, %s6
  %s9 = scalar_select 0, %s8, %s6
  $region1: #{tpu_custom_call.1} parent=0
    #allocation3 [shape = 'u8[131072]{0}', space=vmem, size = 0x20000, scoped, tag = 'input window, operand 0, single buffered']
    #allocation4 [shape = 's32[1]{0}', space=sflag, size = 0x4, scoped, tag = 'scoped memory for tpu_custom_call.1']
    #allocation5 [shape = 's32[1]{0}', space=sflag, size = 0x4, scoped, tag = 'scoped memory for tpu_custom_call.1']
    #allocation6 [shape = 'u8[32768]{0}', space=vmem, size = 0x8000, scoped, tag = 'input window, operand 1, single buffered']
    #allocation7 [shape = 's32[1]{0}', space=sflag, size = 0x4, scoped, tag = 'scoped memory for tpu_custom_call.1']
    #allocation8 [shape = 'u8[32768]{0}', space=vmem, size = 0x8000, scoped, tag = 'input window, operand 3, single buffered']
    #allocation9 [shape = 'u8[262144]{0}', space=vmem, size = 0x40000, scoped, tag = 'output window, operand 0, single buffered']
    %10 = vsyncpa [#allocation4], 0
    %11 = vsyncpa [#allocation7], 0
    %12 = vsyncpa [#allocation5], 0
    // Predicated region
    $region2: #{tpu_custom_call.1} parent=1 // pred_check
      _
    $region3: #{tpu_custom_call.1} parent=1 // pred_check_branch
      %14 = sbr.rel (0) target = $region5
    $region4: #{tpu_custom_call.1} parent=1 // pred_region
      %s16 = ssub.s32 4096, 4096
      %17 = vsyncadd [#allocation4], %s16
      %s18 = sshll.u32 [#allocation3], 4
      %s19 = int_to_ptr.vmem [resolvable:$true] %s18
      %24 = dma.hbm_to_vmem [thread:$0]  %s0, 4096, %s19, [#allocation4], 64, 64, 4
    $region5: #{tpu_custom_call.1} parent=1 // pred_fallthru
      _
    // Predicated region
    $region6: #{tpu_custom_call.1} parent=1 // pred_check
      _
    $region7: #{tpu_custom_call.1} parent=1 // pred_check_branch
      %26 = sbr.rel (0) target = $region9
    $region8: #{tpu_custom_call.1} parent=1 // pred_region
      %s28 = ssub.s32 1024, 1024
      %29 = vsyncadd [#allocation7], %s28
      %s30 = sshll.u32 [#allocation6], 4
      %s31 = int_to_ptr.vmem [resolvable:$true] %s30
      %36 = dma.hbm_to_vmem [thread:$0]  %s1, 1024, %s31, [#allocation7], 64, 64, 4
    $region9: #{tpu_custom_call.1} parent=1 // pred_fallthru
      _
    // Predicated region
    $region10: #{tpu_custom_call.1} parent=1 // pred_check
      _
    $region11: #{tpu_custom_call.1} parent=1 // pred_check_branch
      %38 = sbr.rel (0) target = $region13
    $region12: #{tpu_custom_call.1} parent=1 // pred_region
      _
    $region13: #{tpu_custom_call.1} parent=1 // pred_fallthru
      _
    // Predicated region
    $region14: #{tpu_custom_call.1} parent=1 // pred_check
      _
    $region15: #{tpu_custom_call.1} parent=1 // pred_check_branch
      %40 = sbr.rel (0) target = $region17
    $region16: #{tpu_custom_call.1} parent=1 // pred_region
      %s42 = ssub.s32 1024, 1024
      %43 = vsyncadd [#allocation7], %s42
      %s44 = sshll.u32 [#allocation8], 4
      %s45 = int_to_ptr.vmem [resolvable:$true] %s44
      %50 = dma.hbm_to_vmem [thread:$0]  %s3, 1024, %s45, [#allocation7], 64, 64, 4
    $region17: #{tpu_custom_call.1} parent=1 // pred_fallthru
      _
    // Predicated region
    $region18: #{tpu_custom_call.1} parent=1 // pred_check
      _
    $region19: #{tpu_custom_call.1} parent=1 // pred_check_branch
      %52 = sbr.rel (0) target = $region21
    $region20: #{tpu_custom_call.1} parent=1 // pred_region
      _
    $region21: #{tpu_custom_call.1} parent=1 // pred_fallthru
      _
    // Predicated region
    $region22: #{tpu_custom_call.1} parent=1 // pred_check
      _
    $region23: #{tpu_custom_call.1} parent=1 // pred_check_branch
      %54 = sbr.rel (0) target = $region25
    $region24: #{tpu_custom_call.1} parent=1 // pred_region
      %55 = dma.done [#allocation4], 4096
    $region25: #{tpu_custom_call.1} parent=1 // pred_fallthru
      _
    // Predicated region
    $region26: #{tpu_custom_call.1} parent=1 // pred_check
      _
    $region27: #{tpu_custom_call.1} parent=1 // pred_check_branch
      %57 = sbr.rel (0) target = $region29
    $region28: #{tpu_custom_call.1} parent=1 // pred_region
      %58 = dma.done [#allocation7], 1024
    $region29: #{tpu_custom_call.1} parent=1 // pred_fallthru
      _
    // Predicated region
    $region30: #{tpu_custom_call.1} parent=1 // pred_check
      _
    $region31: #{tpu_custom_call.1} parent=1 // pred_check_branch
      %60 = sbr.rel (0) target = $region33
    $region32: #{tpu_custom_call.1} parent=1 // pred_region
      %61 = dma.done [#allocation7], 1024
    $region33: #{tpu_custom_call.1} parent=1 // pred_fallthru
      _
    %p63 = scmp.eq.s32.totalorder 0, 0
    // Predicated region
    $region34: #{tpu_custom_call.1} parent=1 // pred_check
      %p64 = pneg %p63
    $region35: #{tpu_custom_call.1} parent=1 // pred_check_branch
      %66 = sbr.rel (%p64) target = $region37
    $region36: #{tpu_custom_call.1} parent=1 // pred_region
      %67 = vst [vmem:[#allocation2] sm:$0xff] 0.0
      %68 = vst [vmem:[#allocation2 + $0x8] sm:$0xff] 0.0
      %69 = vst [vmem:[#allocation2 + $0x10] sm:$0xff] 0.0
      %70 = vst [vmem:[#allocation2 + $0x18] sm:$0xff] 0.0
      %71 = vst [vmem:[#allocation2 + $0x20] sm:$0xff] 0.0
      %72 = vst [vmem:[#allocation2 + $0x28] sm:$0xff] 0.0
      %73 = vst [vmem:[#allocation2 + $0x30] sm:$0xff] 0.0
      %74 = vst [vmem:[#allocation2 + $0x38] sm:$0xff] 0.0
      %75 = vst [vmem:[#allocation2 + $0x40] sm:$0xff] 0.0
      %76 = vst [vmem:[#allocation2 + $0x48] sm:$0xff] 0.0
      %77 = vst [vmem:[#allocation2 + $0x50] sm:$0xff] 0.0
      %78 = vst [vmem:[#allocation2 + $0x58] sm:$0xff] 0.0
      %79 = vst [vmem:[#allocation2 + $0x60] sm:$0xff] 0.0
      %80 = vst [vmem:[#allocation2 + $0x68] sm:$0xff] 0.0
      %81 = vst [vmem:[#allocation2 + $0x70] sm:$0xff] 0.0
      %82 = vst [vmem:[#allocation2 + $0x78] sm:$0xff] 0.0
      %83 = vst [vmem:[#allocation2 + $0x80] sm:$0xff] 0.0
      %84 = vst [vmem:[#allocation2 + $0x88] sm:$0xff] 0.0
      %85 = vst [vmem:[#allocation2 + $0x90] sm:$0xff] 0.0
      %86 = vst [vmem:[#allocation2 + $0x98] sm:$0xff] 0.0
      %87 = vst [vmem:[#allocation2 + $0xa0] sm:$0xff] 0.0
      %88 = vst [vmem:[#allocation2 + $0xa8] sm:$0xff] 0.0
      %89 = vst [vmem:[#allocation2 + $0xb0] sm:$0xff] 0.0
      %90 = vst [vmem:[#allocation2 + $0xb8] sm:$0xff] 0.0
      %91 = vst [vmem:[#allocation2 + $0xc0] sm:$0xff] 0.0
      %92 = vst [vmem:[#allocation2 + $0xc8] sm:$0xff] 0.0
      %93 = vst [vmem:[#allocation2 + $0xd0] sm:$0xff] 0.0
      %94 = vst [vmem:[#allocation2 + $0xd8] sm:$0xff] 0.0
      %95 = vst [vmem:[#allocation2 + $0xe0] sm:$0xff] 0.0
      %96 = vst [vmem:[#allocation2 + $0xe8] sm:$0xff] 0.0
      %97 = vst [vmem:[#allocation2 + $0xf0] sm:$0xff] 0.0
      %98 = vst [vmem:[#allocation2 + $0xf8] sm:$0xff] 0.0
      %99 = vst [vmem:[#allocation2 + $0x100] sm:$0xff] 0.0
      %100 = vst [vmem:[#allocation2 + $0x108] sm:$0xff] 0.0
      %101 = vst [vmem:[#allocation2 + $0x110] sm:$0xff] 0.0
      %102 = vst [vmem:[#allocation2 + $0x118] sm:$0xff] 0.0
      %103 = vst [vmem:[#allocation2 + $0x120] sm:$0xff] 0.0
      %104 = vst [vmem:[#allocation2 + $0x128] sm:$0xff] 0.0
      %105 = vst [vmem:[#allocation2 + $0x130] sm:$0xff] 0.0
      %106 = vst [vmem:[#allocation2 + $0x138] sm:$0xff] 0.0
      %107 = vst [vmem:[#allocation2 + $0x140] sm:$0xff] 0.0
      %108 = vst [vmem:[#allocation2 + $0x148] sm:$0xff] 0.0
      %109 = vst [vmem:[#allocation2 + $0x150] sm:$0xff] 0.0
      %110 = vst [vmem:[#allocation2 + $0x158] sm:$0xff] 0.0
      %111 = vst [vmem:[#allocation2 + $0x160] sm:$0xff] 0.0
      %112 = vst [vmem:[#allocation2 + $0x168] sm:$0xff] 0.0
      %113 = vst [vmem:[#allocation2 + $0x170] sm:$0xff] 0.0
      %114 = vst [vmem:[#allocation2 + $0x178] sm:$0xff] 0.0
      %115 = vst [vmem:[#allocation2 + $0x180] sm:$0xff] 0.0
      %116 = vst [vmem:[#allocation2 + $0x188] sm:$0xff] 0.0
      %117 = vst [vmem:[#allocation2 + $0x190] sm:$0xff] 0.0
      %118 = vst [vmem:[#allocation2 + $0x198] sm:$0xff] 0.0
      %119 = vst [vmem:[#allocation2 + $0x1a0] sm:$0xff] 0.0
      %120 = vst [vmem:[#allocation2 + $0x1a8] sm:$0xff] 0.0
      %121 = vst [vmem:[#allocation2 + $0x1b0] sm:$0xff] 0.0
      %122 = vst [vmem:[#allocation2 + $0x1b8] sm:$0xff] 0.0
      %123 = vst [vmem:[#allocation2 + $0x1c0] sm:$0xff] 0.0
      %124 = vst [vmem:[#allocation2 + $0x1c8] sm:$0xff] 0.0
      %125 = vst [vmem:[#allocation2 + $0x1d0] sm:$0xff] 0.0
      %126 = vst [vmem:[#allocation2 + $0x1d8] sm:$0xff] 0.0
      %127 = vst [vmem:[#allocation2 + $0x1e0] sm:$0xff] 0.0
      %128 = vst [vmem:[#allocation2 + $0x1e8] sm:$0xff] 0.0
      %129 = vst [vmem:[#allocation2 + $0x1f0] sm:$0xff] 0.0
      %130 = vst [vmem:[#allocation2 + $0x1f8] sm:$0xff] 0.0
    $region37: #{tpu_custom_call.1} parent=1 // pred_fallthru
      _
    %v131 = vld [vmem:[#allocation2] sm:$0xff]
    %v132 = vld [vmem:[#allocation2 + $0x8] sm:$0xff]
    %v133 = vld [vmem:[#allocation2 + $0x10] sm:$0xff]
    %v134 = vld [vmem:[#allocation2 + $0x18] sm:$0xff]
    %v135 = vld [vmem:[#allocation2 + $0x20] sm:$0xff]
    %v136 = vld [vmem:[#allocation2 + $0x28] sm:$0xff]
    %v137 = vld [vmem:[#allocation2 + $0x30] sm:$0xff]
    %v138 = vld [vmem:[#allocation2 + $0x38] sm:$0xff]
    %v139 = vld [vmem:[#allocation2 + $0x40] sm:$0xff]
    %v140 = vld [vmem:[#allocation2 + $0x48] sm:$0xff]
    %v141 = vld [vmem:[#allocation2 + $0x50] sm:$0xff]
    %v142 = vld [vmem:[#allocation2 + $0x58] sm:$0xff]
    %v143 = vld [vmem:[#allocation2 + $0x60] sm:$0xff]
    %v144 = vld [vmem:[#allocation2 + $0x68] sm:$0xff]
    %v145 = vld [vmem:[#allocation2 + $0x70] sm:$0xff]
    %v146 = vld [vmem:[#allocation2 + $0x78] sm:$0xff]
    %v147 = vld [vmem:[#allocation2 + $0x80] sm:$0xff]
    %v148 = vld [vmem:[#allocation2 + $0x88] sm:$0xff]
    %v149 = vld [vmem:[#allocation2 + $0x90] sm:$0xff]
    %v150 = vld [vmem:[#allocation2 + $0x98] sm:$0xff]
    %v151 = vld [vmem:[#allocation2 + $0xa0] sm:$0xff]
    %v152 = vld [vmem:[#allocation2 + $0xa8] sm:$0xff]
    %v153 = vld [vmem:[#allocation2 + $0xb0] sm:$0xff]
    %v154 = vld [vmem:[#allocation2 + $0xb8] sm:$0xff]
    %v155 = vld [vmem:[#allocation2 + $0xc0] sm:$0xff]
    %v156 = vld [vmem:[#allocation2 + $0xc8] sm:$0xff]
    %v157 = vld [vmem:[#allocation2 + $0xd0] sm:$0xff]
    %v158 = vld [vmem:[#allocation2 + $0xd8] sm:$0xff]
    %v159 = vld [vmem:[#allocation2 + $0xe0] sm:$0xff]
    %v160 = vld [vmem:[#allocation2 + $0xe8] sm:$0xff]
    %v161 = vld [vmem:[#allocation2 + $0xf0] sm:$0xff]
    %v162 = vld [vmem:[#allocation2 + $0xf8] sm:$0xff]
    %v163 = vld [vmem:[#allocation2 + $0x100] sm:$0xff]
    %v164 = vld [vmem:[#allocation2 + $0x108] sm:$0xff]
    %v165 = vld [vmem:[#allocation2 + $0x110] sm:$0xff]
    %v166 = vld [vmem:[#allocation2 + $0x118] sm:$0xff]
    %v167 = vld [vmem:[#allocation2 + $0x120] sm:$0xff]
    %v168 = vld [vmem:[#allocation2 + $0x128] sm:$0xff]
    %v169 = vld [vmem:[#allocation2 + $0x130] sm:$0xff]
    %v170 = vld [vmem:[#allocation2 + $0x138] sm:$0xff]
    %v171 = vld [vmem:[#allocation2 + $0x140] sm:$0xff]
    %v172 = vld [vmem:[#allocation2 + $0x148] sm:$0xff]
    %v173 = vld [vmem:[#allocation2 + $0x150] sm:$0xff]
    %v174 = vld [vmem:[#allocation2 + $0x158] sm:$0xff]
    %v175 = vld [vmem:[#allocation2 + $0x160] sm:$0xff]
    %v176 = vld [vmem:[#allocation2 + $0x168] sm:$0xff]
    %v177 = vld [vmem:[#allocation2 + $0x170] sm:$0xff]
    %v178 = vld [vmem:[#allocation2 + $0x178] sm:$0xff]
    %v179 = vld [vmem:[#allocation2 + $0x180] sm:$0xff]
    %v180 = vld [vmem:[#allocation2 + $0x188] sm:$0xff]
    %v181 = vld [vmem:[#allocation2 + $0x190] sm:$0xff]
    %v182 = vld [vmem:[#allocation2 + $0x198] sm:$0xff]
    %v183 = vld [vmem:[#allocation2 + $0x1a0] sm:$0xff]
    %v184 = vld [vmem:[#allocation2 + $0x1a8] sm:$0xff]
    %v185 = vld [vmem:[#allocation2 + $0x1b0] sm:$0xff]
    %v186 = vld [vmem:[#allocation2 + $0x1b8] sm:$0xff]
    %v187 = vld [vmem:[#allocation2 + $0x1c0] sm:$0xff]
    %v188 = vld [vmem:[#allocation2 + $0x1c8] sm:$0xff]
    %v189 = vld [vmem:[#allocation2 + $0x1d0] sm:$0xff]
    %v190 = vld [vmem:[#allocation2 + $0x1d8] sm:$0xff]
    %v191 = vld [vmem:[#allocation2 + $0x1e0] sm:$0xff]
    %v192 = vld [vmem:[#allocation2 + $0x1e8] sm:$0xff]
    %v193 = vld [vmem:[#allocation2 + $0x1f0] sm:$0xff]
    %v194 = vld [vmem:[#allocation2 + $0x1f8] sm:$0xff]
    %v195 = vld [vmem:[#allocation3] sm:$0xf]
    %v196 = vld [vmem:[#allocation3 + $0x4] sm:$0xf]
    %v197 = vld [vmem:[#allocation3 + $0x8] sm:$0xf]
    %v198 = vld [vmem:[#allocation3 + $0xc] sm:$0xf]
    %v199 = vld [vmem:[#allocation3 + $0x10] sm:$0xf]
    %v200 = vld [vmem:[#allocation3 + $0x14] sm:$0xf]
    %v201 = vld [vmem:[#allocation3 + $0x18] sm:$0xf]
    %v202 = vld [vmem:[#allocation3 + $0x1c] sm:$0xf]
    %v203 = vld [vmem:[#allocation3 + $0x20] sm:$0xf]
    %v204 = vld [vmem:[#allocation3 + $0x24] sm:$0xf]
    %v205 = vld [vmem:[#allocation3 + $0x28] sm:$0xf]
    %v206 = vld [vmem:[#allocation3 + $0x2c] sm:$0xf]
    %v207 = vld [vmem:[#allocation3 + $0x30] sm:$0xf]
    %v208 = vld [vmem:[#allocation3 + $0x34] sm:$0xf]
    %v209 = vld [vmem:[#allocation3 + $0x38] sm:$0xf]
    %v210 = vld [vmem:[#allocation3 + $0x3c] sm:$0xf]
    %v211 = vld [vmem:[#allocation3 + $0x40] sm:$0xf]
    %v212 = vld [vmem:[#allocation3 + $0x44] sm:$0xf]
    %v213 = vld [vmem:[#allocation3 + $0x48] sm:$0xf]
    %v214 = vld [vmem:[#allocation3 + $0x4c] sm:$0xf]
    %v215 = vld [vmem:[#allocation3 + $0x50] sm:$0xf]
    %v216 = vld [vmem:[#allocation3 + $0x54] sm:$0xf]
    %v217 = vld [vmem:[#allocation3 + $0x58] sm:$0xf]
    %v218 = vld [vmem:[#allocation3 + $0x5c] sm:$0xf]
    %v219 = vld [vmem:[#allocation3 + $0x60] sm:$0xf]
    %v220 = vld [vmem:[#allocation3 + $0x64] sm:$0xf]
    %v221 = vld [vmem:[#allocation3 + $0x68] sm:$0xf]
    %v222 = vld [vmem:[#allocation3 + $0x6c] sm:$0xf]
    %v223 = vld [vmem:[#allocation3 + $0x70] sm:$0xf]
    %v224 = vld [vmem:[#allocation3 + $0x74] sm:$0xf]
    %v225 = vld [vmem:[#allocation3 + $0x78] sm:$0xf]
    %v226 = vld [vmem:[#allocation3 + $0x7c] sm:$0xf]
    %v227 = vld [vmem:[#allocation3 + $0x80] sm:$0xf]
    %v228 = vld [vmem:[#allocation3 + $0x84] sm:$0xf]
    %v229 = vld [vmem:[#allocation3 + $0x88] sm:$0xf]
    %v230 = vld [vmem:[#allocation3 + $0x8c] sm:$0xf]
    %v231 = vld [vmem:[#allocation3 + $0x90] sm:$0xf]
    %v232 = vld [vmem:[#allocation3 + $0x94] sm:$0xf]
    %v233 = vld [vmem:[#allocation3 + $0x98] sm:$0xf]
    %v234 = vld [vmem:[#allocation3 + $0x9c] sm:$0xf]
    %v235 = vld [vmem:[#allocation3 + $0xa0] sm:$0xf]
    %v236 = vld [vmem:[#allocation3 + $0xa4] sm:$0xf]
    %v237 = vld [vmem:[#allocation3 + $0xa8] sm:$0xf]
    %v238 = vld [vmem:[#allocation3 + $0xac] sm:$0xf]
    %v239 = vld [vmem:[#allocation3 + $0xb0] sm:$0xf]
    %v240 = vld [vmem:[#allocation3 + $0xb4] sm:$0xf]
    %v241 = vld [vmem:[#allocation3 + $0xb8] sm:$0xf]
    %v242 = vld [vmem:[#allocation3 + $0xbc] sm:$0xf]
    %v243 = vld [vmem:[#allocation3 + $0xc0] sm:$0xf]
    %v244 = vld [vmem:[#allocation3 + $0xc4] sm:$0xf]
    %v245 = vld [vmem:[#allocation3 + $0xc8] sm:$0xf]
    %v246 = vld [vmem:[#allocation3 + $0xcc] sm:$0xf]
    %v247 = vld [vmem:[#allocation3 + $0xd0] sm:$0xf]
    %v248 = vld [vmem:[#allocation3 + $0xd4] sm:$0xf]
    %v249 = vld [vmem:[#allocation3 + $0xd8] sm:$0xf]
    %v250 = vld [vmem:[#allocation3 + $0xdc] sm:$0xf]
    %v251 = vld [vmem:[#allocation3 + $0xe0] sm:$0xf]
    %v252 = vld [vmem:[#allocation3 + $0xe4] sm:$0xf]
    %v253 = vld [vmem:[#allocation3 + $0xe8] sm:$0xf]
    %v254 = vld [vmem:[#allocation3 + $0xec] sm:$0xf]
    %v255 = vld [vmem:[#allocation3 + $0xf0] sm:$0xf]
    %v256 = vld [vmem:[#allocation3 + $0xf4] sm:$0xf]
    %v257 = vld [vmem:[#allocation3 + $0xf8] sm:$0xf]
    %v258 = vld [vmem:[#allocation3 + $0xfc] sm:$0xf]
    %v259 = vld [vmem:[#allocation6] sm:$0xf]
    %v260 = vld [vmem:[#allocation6 + $0x4] sm:$0xf]
    %v261 = vld [vmem:[#allocation6 + $0x8] sm:$0xf]
    %v262 = vld [vmem:[#allocation6 + $0xc] sm:$0xf]
    %v263 = vld [vmem:[#allocation6 + $0x10] sm:$0xf]
    %v264 = vld [vmem:[#allocation6 + $0x14] sm:$0xf]
    %v265 = vld [vmem:[#allocation6 + $0x18] sm:$0xf]
    %v266 = vld [vmem:[#allocation6 + $0x1c] sm:$0xf]
    %v267 = vld [vmem:[#allocation6 + $0x20] sm:$0xf]
    %v268 = vld [vmem:[#allocation6 + $0x24] sm:$0xf]
    %v269 = vld [vmem:[#allocation6 + $0x28] sm:$0xf]
    %v270 = vld [vmem:[#allocation6 + $0x2c] sm:$0xf]
    %v271 = vld [vmem:[#allocation6 + $0x30] sm:$0xf]
    %v272 = vld [vmem:[#allocation6 + $0x34] sm:$0xf]
    %v273 = vld [vmem:[#allocation6 + $0x38] sm:$0xf]
    %v274 = vld [vmem:[#allocation6 + $0x3c] sm:$0xf]
    %v339 = vunpack.c.l.b16 %v195
    %v340 = vunpack.c.l.b16 %v196
    %v341 = vunpack.c.l.b16 %v197
    %v342 = vunpack.c.l.b16 %v198
    %v343 = vunpack.c.l.b16 %v199
    %v344 = vunpack.c.l.b16 %v200
    %v345 = vunpack.c.l.b16 %v201
    %v346 = vunpack.c.l.b16 %v202
    %v347 = vunpack.c.l.b16 %v203
    %v348 = vunpack.c.l.b16 %v204
    %v349 = vunpack.c.l.b16 %v205
    %v350 = vunpack.c.l.b16 %v206
    %v351 = vunpack.c.l.b16 %v207
    %v352 = vunpack.c.l.b16 %v208
    %v353 = vunpack.c.l.b16 %v209
    %v354 = vunpack.c.l.b16 %v210
    %v355 = vunpack.c.l.b16 %v211
    %v356 = vunpack.c.l.b16 %v212
    %v357 = vunpack.c.l.b16 %v213
    %v358 = vunpack.c.l.b16 %v214
    %v359 = vunpack.c.l.b16 %v215
    %v360 = vunpack.c.l.b16 %v216
    %v361 = vunpack.c.l.b16 %v217
    %v362 = vunpack.c.l.b16 %v218
    %v363 = vunpack.c.l.b16 %v219
    %v364 = vunpack.c.l.b16 %v220
    %v365 = vunpack.c.l.b16 %v221
    %v366 = vunpack.c.l.b16 %v222
    %v367 = vunpack.c.l.b16 %v223
    %v368 = vunpack.c.l.b16 %v224
    %v369 = vunpack.c.l.b16 %v225
    %v370 = vunpack.c.l.b16 %v226
    %v371 = vunpack.c.l.b16 %v227
    %v372 = vunpack.c.l.b16 %v228
    %v373 = vunpack.c.l.b16 %v229
    %v374 = vunpack.c.l.b16 %v230
    %v375 = vunpack.c.l.b16 %v231
    %v376 = vunpack.c.l.b16 %v232
    %v377 = vunpack.c.l.b16 %v233
    %v378 = vunpack.c.l.b16 %v234
    %v379 = vunpack.c.l.b16 %v235
    %v380 = vunpack.c.l.b16 %v236
    %v381 = vunpack.c.l.b16 %v237
    %v382 = vunpack.c.l.b16 %v238
    %v383 = vunpack.c.l.b16 %v239
    %v384 = vunpack.c.l.b16 %v240
    %v385 = vunpack.c.l.b16 %v241
    %v386 = vunpack.c.l.b16 %v242
    %v387 = vunpack.c.l.b16 %v243
    %v388 = vunpack.c.l.b16 %v244
    %v389 = vunpack.c.l.b16 %v245
    %v390 = vunpack.c.l.b16 %v246
    %v391 = vunpack.c.l.b16 %v247
    %v392 = vunpack.c.l.b16 %v248
    %v393 = vunpack.c.l.b16 %v249
    %v394 = vunpack.c.l.b16 %v250
    %v395 = vunpack.c.l.b16 %v251
    %v396 = vunpack.c.l.b16 %v252
    %v397 = vunpack.c.l.b16 %v253
    %v398 = vunpack.c.l.b16 %v254
    %v399 = vunpack.c.l.b16 %v255
    %v400 = vunpack.c.l.b16 %v256
    %v401 = vunpack.c.l.b16 %v257
    %v402 = vunpack.c.l.b16 %v258
    %v403 = vpack.c.b16 %v340, %v339
    %v404 = vpack.c.b16 %v342, %v341
    %v405 = vpack.c.b16 %v344, %v343
    %v406 = vpack.c.b16 %v346, %v345
    %v407 = vpack.c.b16 %v348, %v347
    %v408 = vpack.c.b16 %v350, %v349
    %v409 = vpack.c.b16 %v352, %v351
    %v410 = vpack.c.b16 %v354, %v353
    %v411 = vpack.c.b16 %v356, %v355
    %v412 = vpack.c.b16 %v358, %v357
    %v413 = vpack.c.b16 %v360, %v359
    %v414 = vpack.c.b16 %v362, %v361
    %v415 = vpack.c.b16 %v364, %v363
    %v416 = vpack.c.b16 %v366, %v365
    %v417 = vpack.c.b16 %v368, %v367
    %v418 = vpack.c.b16 %v370, %v369
    %v419 = vpack.c.b16 %v372, %v371
    %v420 = vpack.c.b16 %v374, %v373
    %v421 = vpack.c.b16 %v376, %v375
    %v422 = vpack.c.b16 %v378, %v377
    %v423 = vpack.c.b16 %v380, %v379
    %v424 = vpack.c.b16 %v382, %v381
    %v425 = vpack.c.b16 %v384, %v383
    %v426 = vpack.c.b16 %v386, %v385
    %v427 = vpack.c.b16 %v388, %v387
    %v428 = vpack.c.b16 %v390, %v389
    %v429 = vpack.c.b16 %v392, %v391
    %v430 = vpack.c.b16 %v394, %v393
    %v431 = vpack.c.b16 %v396, %v395
    %v432 = vpack.c.b16 %v398, %v397
    %v433 = vpack.c.b16 %v400, %v399
    %v434 = vpack.c.b16 %v402, %v401
    %v483 = vunpack.c.l.b16 %v259
    %v484 = vunpack.c.l.b16 %v260
    %v485 = vunpack.c.l.b16 %v261
    %v486 = vunpack.c.l.b16 %v262
    %v487 = vunpack.c.l.b16 %v263
    %v488 = vunpack.c.l.b16 %v264
    %v489 = vunpack.c.l.b16 %v265
    %v490 = vunpack.c.l.b16 %v266
    %v491 = vunpack.c.l.b16 %v267
    %v492 = vunpack.c.l.b16 %v268
    %v493 = vunpack.c.l.b16 %v269
    %v494 = vunpack.c.l.b16 %v270
    %v495 = vunpack.c.l.b16 %v271
    %v496 = vunpack.c.l.b16 %v272
    %v497 = vunpack.c.l.b16 %v273
    %v498 = vunpack.c.l.b16 %v274
    %v499 = vpack.c.b16 %v484, %v483
    %v500 = vpack.c.b16 %v486, %v485
    %v501 = vpack.c.b16 %v488, %v487
    %v502 = vpack.c.b16 %v490, %v489
    %v503 = vpack.c.b16 %v492, %v491
    %v504 = vpack.c.b16 %v494, %v493
    %v505 = vpack.c.b16 %v496, %v495
    %v506 = vpack.c.b16 %v498, %v497
    %515 = vmatprep.subr.bf16.mxu0 0
    %516 = vmatpush1.bf16.msra.mxu0 %v499
    %517 = vmatprep.subr.bf16.mxu0 0
    %518 = vmatpush1.bf16.msra.mxu0 %v500
    %519 = vmatprep.subr.bf16.mxu0 0
    %520 = vmatpush1.bf16.msra.mxu0 %v501
    %521 = vmatprep.subr.bf16.mxu0 0
    %522 = vmatpush1.bf16.msra.mxu0 %v502
    %523 = vmatprep.subr.bf16.mxu0 0
    %524 = vmatpush1.bf16.msra.mxu0 %v503
    %525 = vmatprep.subr.bf16.mxu0 0
    %526 = vmatpush1.bf16.msra.mxu0 %v504
    %527 = vmatprep.subr.bf16.mxu0 0
    %528 = vmatpush1.bf16.msra.mxu0 %v505
    %529 = vmatprep.subr.bf16.mxu0 0
    %530 = vmatpush1.bf16.msra.mxu0 %v506
    %531 = vmatprep.subr.bf16.mxu0 0
    %532 = vmatpush1.bf16.msra.mxu0 0
    %533 = vmatprep.subr.bf16.mxu0 0
    %534 = vmatpush1.bf16.msra.mxu0 0
    %535 = vmatprep.subr.bf16.mxu0 0
    %536 = vmatpush1.bf16.msra.mxu0 0
    %537 = vmatprep.subr.bf16.mxu0 0
    %538 = vmatpush1.bf16.msra.mxu0 0
    %539 = vmatprep.subr.bf16.mxu0 0
    %540 = vmatpush1.bf16.msra.mxu0 0
    %541 = vmatprep.subr.bf16.mxu0 0
    %542 = vmatpush1.bf16.msra.mxu0 0
    %543 = vmatprep.subr.bf16.mxu0 0
    %544 = vmatpush1.bf16.msra.mxu0 0
    %545 = vmatprep.subr.bf16.mxu0 0
    %546 = vmatpush1.bf16.msra.mxu0 0
    %547 = vmatprep.mubr.bf16.mxu0 0
    %548 = vmatmul.mubr.bf16.gmra.mrb[0].mxu0 %v403
    %v549 = vpop.f32.mrb[0].mxu0
    %v550 = vadd.f32 0.0, %v549
    %v551 = vpop.f32.mrb[0].mxu0
    %v552 = vpop.f32.mrb[0].mxu0
    %v553 = vadd.f32 0.0, %v552
    %v554 = vpop.f32.mrb[0].mxu0
    %555 = vmatprep.mubr.bf16.mxu0 0
    %556 = vmatmul.mubr.bf16.gmra.mrb[0].mxu0 %v404
    %v557 = vpop.f32.mrb[0].mxu0
    %v558 = vadd.f32 0.0, %v557
    %v559 = vpop.f32.mrb[0].mxu0
    %v560 = vpop.f32.mrb[0].mxu0
    %v561 = vadd.f32 0.0, %v560
    %v562 = vpop.f32.mrb[0].mxu0
    %563 = vmatprep.mubr.bf16.mxu0 0
    %564 = vmatmul.mubr.bf16.gmra.mrb[0].mxu0 %v405
    %v565 = vpop.f32.mrb[0].mxu0
    %v566 = vadd.f32 0.0, %v565
    %v567 = vpop.f32.mrb[0].mxu0
    %v568 = vpop.f32.mrb[0].mxu0
    %v569 = vadd.f32 0.0, %v568
    %v570 = vpop.f32.mrb[0].mxu0
    %571 = vmatprep.mubr.bf16.mxu0 0
    %572 = vmatmul.mubr.bf16.gmra.mrb[0].mxu0 %v406
    %v573 = vpop.f32.mrb[0].mxu0
    %v574 = vadd.f32 0.0, %v573
    %v575 = vpop.f32.mrb[0].mxu0
    %v576 = vpop.f32.mrb[0].mxu0
    %v577 = vadd.f32 0.0, %v576
    %v578 = vpop.f32.mrb[0].mxu0
    %579 = vmatprep.mubr.bf16.mxu0 0
    %580 = vmatmul.mubr.bf16.gmra.mrb[0].mxu0 %v407
    %v581 = vpop.f32.mrb[0].mxu0
    %v582 = vadd.f32 0.0, %v581
    %v583 = vpop.f32.mrb[0].mxu0
    %v584 = vpop.f32.mrb[0].mxu0
    %v585 = vadd.f32 0.0, %v584
    %v586 = vpop.f32.mrb[0].mxu0
    %587 = vmatprep.mubr.bf16.mxu0 0
    %588 = vmatmul.mubr.bf16.gmra.mrb[0].mxu0 %v408
    %v589 = vpop.f32.mrb[0].mxu0
    %v590 = vadd.f32 0.0, %v589
    %v591 = vpop.f32.mrb[0].mxu0
    %v592 = vpop.f32.mrb[0].mxu0
    %v593 = vadd.f32 0.0, %v592
    %v594 = vpop.f32.mrb[0].mxu0
    %595 = vmatprep.mubr.bf16.mxu0 0
    %596 = vmatmul.mubr.bf16.gmra.mrb[0].mxu0 %v409
    %v597 = vpop.f32.mrb[0].mxu0
    %v598 = vadd.f32 0.0, %v597
    %v599 = vpop.f32.mrb[0].mxu0
    %v600 = vpop.f32.mrb[0].mxu0
    %v601 = vadd.f32 0.0, %v600
    %v602 = vpop.f32.mrb[0].mxu0
    %603 = vmatprep.mubr.bf16.mxu0 0
    %604 = vmatmul.mubr.bf16.gmra.mrb[0].mxu0 %v410
    %v605 = vpop.f32.mrb[0].mxu0
    %v606 = vadd.f32 0.0, %v605
    %v607 = vpop.f32.mrb[0].mxu0
    %v608 = vpop.f32.mrb[0].mxu0
    %v609 = vadd.f32 0.0, %v608
    %v610 = vpop.f32.mrb[0].mxu0
    %611 = vmatprep.mubr.bf16.mxu0 0
    %612 = vmatmul.mubr.bf16.gmra.mrb[0].mxu0 %v411
    %v613 = vpop.f32.mrb[0].mxu0
    %v614 = vadd.f32 0.0, %v613
    %v615 = vpop.f32.mrb[0].mxu0
    %v616 = vpop.f32.mrb[0].mxu0
    %v617 = vadd.f32 0.0, %v616
    %v618 = vpop.f32.mrb[0].mxu0
    %619 = vmatprep.mubr.bf16.mxu0 0
    %620 = vmatmul.mubr.bf16.gmra.mrb[0].mxu0 %v412
    %v621 = vpop.f32.mrb[0].mxu0
    %v622 = vadd.f32 0.0, %v621
    %v623 = vpop.f32.mrb[0].mxu0
    %v624 = vpop.f32.mrb[0].mxu0
    %v625 = vadd.f32 0.0, %v624
    %v626 = vpop.f32.mrb[0].mxu0
    %627 = vmatprep.mubr.bf16.mxu0 0
    %628 = vmatmul.mubr.bf16.gmra.mrb[0].mxu0 %v413
    %v629 = vpop.f32.mrb[0].mxu0
    %v630 = vadd.f32 0.0, %v629
    %v631 = vpop.f32.mrb[0].mxu0
    %v632 = vpop.f32.mrb[0].mxu0
    %v633 = vadd.f32 0.0, %v632
    %v634 = vpop.f32.mrb[0].mxu0
    %635 = vmatprep.mubr.bf16.mxu0 0
    %636 = vmatmul.mubr.bf16.gmra.mrb[0].mxu0 %v414
    %v637 = vpop.f32.mrb[0].mxu0
    %v638 = vadd.f32 0.0, %v637
    %v639 = vpop.f32.mrb[0].mxu0
    %v640 = vpop.f32.mrb[0].mxu0
    %v641 = vadd.f32 0.0, %v640
    %v642 = vpop.f32.mrb[0].mxu0
    %643 = vmatprep.mubr.bf16.mxu0 0
    %644 = vmatmul.mubr.bf16.gmra.mrb[0].mxu0 %v415
    %v645 = vpop.f32.mrb[0].mxu0
    %v646 = vadd.f32 0.0, %v645
    %v647 = vpop.f32.mrb[0].mxu0
    %v648 = vpop.f32.mrb[0].mxu0
    %v649 = vadd.f32 0.0, %v648
    %v650 = vpop.f32.mrb[0].mxu0
    %651 = vmatprep.mubr.bf16.mxu0 0
    %652 = vmatmul.mubr.bf16.gmra.mrb[0].mxu0 %v416
    %v653 = vpop.f32.mrb[0].mxu0
    %v654 = vadd.f32 0.0, %v653
    %v655 = vpop.f32.mrb[0].mxu0
    %v656 = vpop.f32.mrb[0].mxu0
    %v657 = vadd.f32 0.0, %v656
    %v658 = vpop.f32.mrb[0].mxu0
    %659 = vmatprep.mubr.bf16.mxu0 0
    %660 = vmatmul.mubr.bf16.gmra.mrb[0].mxu0 %v417
    %v661 = vpop.f32.mrb[0].mxu0
    %v662 = vadd.f32 0.0, %v661
    %v663 = vpop.f32.mrb[0].mxu0
    %v664 = vpop.f32.mrb[0].mxu0
    %v665 = vadd.f32 0.0, %v664
    %v666 = vpop.f32.mrb[0].mxu0
    %667 = vmatprep.mubr.bf16.mxu0 0
    %668 = vmatmul.mubr.bf16.gmra.mrb[0].mxu0 %v418
    %v669 = vpop.f32.mrb[0].mxu0
    %v670 = vadd.f32 0.0, %v669
    %v671 = vpop.f32.mrb[0].mxu0
    %v672 = vpop.f32.mrb[0].mxu0
    %v673 = vadd.f32 0.0, %v672
    %v674 = vpop.f32.mrb[0].mxu0
    %675 = vmatprep.mubr.bf16.mxu0 0
    %676 = vmatmul.mubr.bf16.gmra.mrb[0].mxu0 %v419
    %v677 = vpop.f32.mrb[0].mxu0
    %v678 = vadd.f32 0.0, %v677
    %v679 = vpop.f32.mrb[0].mxu0
    %v680 = vpop.f32.mrb[0].mxu0
    %v681 = vadd.f32 0.0, %v680
    %v682 = vpop.f32.mrb[0].mxu0
    %683 = vmatprep.mubr.bf16.mxu0 0
    %684 = vmatmul.mubr.bf16.gmra.mrb[0].mxu0 %v420
    %v685 = vpop.f32.mrb[0].mxu0
    %v686 = vadd.f32 0.0, %v685
    %v687 = vpop.f32.mrb[0].mxu0
    %v688 = vpop.f32.mrb[0].mxu0
    %v689 = vadd.f32 0.0, %v688
    %v690 = vpop.f32.mrb[0].mxu0
    %691 = vmatprep.mubr.bf16.mxu0 0
    %692 = vmatmul.mubr.bf16.gmra.mrb[0].mxu0 %v421
    %v693 = vpop.f32.mrb[0].mxu0
    %v694 = vadd.f32 0.0, %v693
    %v695 = vpop.f32.mrb[0].mxu0
    %v696 = vpop.f32.mrb[0].mxu0
    %v697 = vadd.f32 0.0, %v696
    %v698 = vpop.f32.mrb[0].mxu0
    %699 = vmatprep.mubr.bf16.mxu0 0
    %700 = vmatmul.mubr.bf16.gmra.mrb[0].mxu0 %v422
    %v701 = vpop.f32.mrb[0].mxu0
    %v702 = vadd.f32 0.0, %v701
    %v703 = vpop.f32.mrb[0].mxu0
    %v704 = vpop.f32.mrb[0].mxu0
    %v705 = vadd.f32 0.0, %v704
    %v706 = vpop.f32.mrb[0].mxu0
    %707 = vmatprep.mubr.bf16.mxu0 0
    %708 = vmatmul.mubr.bf16.gmra.mrb[0].mxu0 %v423
    %v709 = vpop.f32.mrb[0].mxu0
    %v710 = vadd.f32 0.0, %v709
    %v711 = vpop.f32.mrb[0].mxu0
    %v712 = vpop.f32.mrb[0].mxu0
    %v713 = vadd.f32 0.0, %v712
    %v714 = vpop.f32.mrb[0].mxu0
    %715 = vmatprep.mubr.bf16.mxu0 0
    %716 = vmatmul.mubr.bf16.gmra.mrb[0].mxu0 %v424
    %v717 = vpop.f32.mrb[0].mxu0
    %v718 = vadd.f32 0.0, %v717
    %v719 = vpop.f32.mrb[0].mxu0
    %v720 = vpop.f32.mrb[0].mxu0
    %v721 = vadd.f32 0.0, %v720
    %v722 = vpop.f32.mrb[0].mxu0
    %723 = vmatprep.mubr.bf16.mxu0 0
    %724 = vmatmul.mubr.bf16.gmra.mrb[0].mxu0 %v425
    %v725 = vpop.f32.mrb[0].mxu0
    %v726 = vadd.f32 0.0, %v725
    %v727 = vpop.f32.mrb[0].mxu0
    %v728 = vpop.f32.mrb[0].mxu0
    %v729 = vadd.f32 0.0, %v728
    %v730 = vpop.f32.mrb[0].mxu0
    %731 = vmatprep.mubr.bf16.mxu0 0
    %732 = vmatmul.mubr.bf16.gmra.mrb[0].mxu0 %v426
    %v733 = vpop.f32.mrb[0].mxu0
    %v734 = vadd.f32 0.0, %v733
    %v735 = vpop.f32.mrb[0].mxu0
    %v736 = vpop.f32.mrb[0].mxu0
    %v737 = vadd.f32 0.0, %v736
    %v738 = vpop.f32.mrb[0].mxu0
    %739 = vmatprep.mubr.bf16.mxu0 0
    %740 = vmatmul.mubr.bf16.gmra.mrb[0].mxu0 %v427
    %v741 = vpop.f32.mrb[0].mxu0
    %v742 = vadd.f32 0.0, %v741
    %v743 = vpop.f32.mrb[0].mxu0
    %v744 = vpop.f32.mrb[0].mxu0
    %v745 = vadd.f32 0.0, %v744
    %v746 = vpop.f32.mrb[0].mxu0
    %747 = vmatprep.mubr.bf16.mxu0 0
    %748 = vmatmul.mubr.bf16.gmra.mrb[0].mxu0 %v428
    %v749 = vpop.f32.mrb[0].mxu0
    %v750 = vadd.f32 0.0, %v749
    %v751 = vpop.f32.mrb[0].mxu0
    %v752 = vpop.f32.mrb[0].mxu0
    %v753 = vadd.f32 0.0, %v752
    %v754 = vpop.f32.mrb[0].mxu0
    %755 = vmatprep.mubr.bf16.mxu0 0
    %756 = vmatmul.mubr.bf16.gmra.mrb[0].mxu0 %v429
    %v757 = vpop.f32.mrb[0].mxu0
    %v758 = vadd.f32 0.0, %v757
    %v759 = vpop.f32.mrb[0].mxu0
    %v760 = vpop.f32.mrb[0].mxu0
    %v761 = vadd.f32 0.0, %v760
    %v762 = vpop.f32.mrb[0].mxu0
    %763 = vmatprep.mubr.bf16.mxu0 0
    %764 = vmatmul.mubr.bf16.gmra.mrb[0].mxu0 %v430
    %v765 = vpop.f32.mrb[0].mxu0
    %v766 = vadd.f32 0.0, %v765
    %v767 = vpop.f32.mrb[0].mxu0
    %v768 = vpop.f32.mrb[0].mxu0
    %v769 = vadd.f32 0.0, %v768
    %v770 = vpop.f32.mrb[0].mxu0
    %771 = vmatprep.mubr.bf16.mxu0 0
    %772 = vmatmul.mubr.bf16.gmra.mrb[0].mxu0 %v431
    %v773 = vpop.f32.mrb[0].mxu0
    %v774 = vadd.f32 0.0, %v773
    %v775 = vpop.f32.mrb[0].mxu0
    %v776 = vpop.f32.mrb[0].mxu0
    %v777 = vadd.f32 0.0, %v776
    %v778 = vpop.f32.mrb[0].mxu0
    %779 = vmatprep.mubr.bf16.mxu0 0
    %780 = vmatmul.mubr.bf16.gmra.mrb[0].mxu0 %v432
    %v781 = vpop.f32.mrb[0].mxu0
    %v782 = vadd.f32 0.0, %v781
    %v783 = vpop.f32.mrb[0].mxu0
    %v784 = vpop.f32.mrb[0].mxu0
    %v785 = vadd.f32 0.0, %v784
    %v786 = vpop.f32.mrb[0].mxu0
    %787 = vmatprep.mubr.bf16.mxu0 0
    %788 = vmatmul.mubr.bf16.gmra.mrb[0].mxu0 %v433
    %v789 = vpop.f32.mrb[0].mxu0
    %v790 = vadd.f32 0.0, %v789
    %v791 = vpop.f32.mrb[0].mxu0
    %v792 = vpop.f32.mrb[0].mxu0
    %v793 = vadd.f32 0.0, %v792
    %v794 = vpop.f32.mrb[0].mxu0
    %795 = vmatprep.mubr.bf16.mxu0 0
    %796 = vmatmul.mubr.bf16.gmra.mrb[0].mxu0 %v434
    %v797 = vpop.f32.mrb[0].mxu0
    %v798 = vadd.f32 0.0, %v797
    %v799 = vpop.f32.mrb[0].mxu0
    %v800 = vpop.f32.mrb[0].mxu0
    %v801 = vadd.f32 0.0, %v800
    %v802 = vpop.f32.mrb[0].mxu0
    %803 = vdwg.mxu0
    %v804 = vadd.f32 %v131, %v550
    %v805 = vadd.f32 %v132, %v553
    %v806 = vadd.f32 %v133, %v558
    %v807 = vadd.f32 %v134, %v561
    %v808 = vadd.f32 %v135, %v566
    %v809 = vadd.f32 %v136, %v569
    %v810 = vadd.f32 %v137, %v574
    %v811 = vadd.f32 %v138, %v577
    %v812 = vadd.f32 %v139, %v582
    %v813 = vadd.f32 %v140, %v585
    %v814 = vadd.f32 %v141, %v590
    %v815 = vadd.f32 %v142, %v593
    %v816 = vadd.f32 %v143, %v598
    %v817 = vadd.f32 %v144, %v601
    %v818 = vadd.f32 %v145, %v606
    %v819 = vadd.f32 %v146, %v609
    %v820 = vadd.f32 %v147, %v614
    %v821 = vadd.f32 %v148, %v617
    %v822 = vadd.f32 %v149, %v622
    %v823 = vadd.f32 %v150, %v625
    %v824 = vadd.f32 %v151, %v630
    %v825 = vadd.f32 %v152, %v633
    %v826 = vadd.f32 %v153, %v638
    %v827 = vadd.f32 %v154, %v641
    %v828 = vadd.f32 %v155, %v646
    %v829 = vadd.f32 %v156, %v649
    %v830 = vadd.f32 %v157, %v654
    %v831 = vadd.f32 %v158, %v657
    %v832 = vadd.f32 %v159, %v662
    %v833 = vadd.f32 %v160, %v665
    %v834 = vadd.f32 %v161, %v670
    %v835 = vadd.f32 %v162, %v673
    %v836 = vadd.f32 %v163, %v678
    %v837 = vadd.f32 %v164, %v681
    %v838 = vadd.f32 %v165, %v686
    %v839 = vadd.f32 %v166, %v689
    %v840 = vadd.f32 %v167, %v694
    %v841 = vadd.f32 %v168, %v697
    %v842 = vadd.f32 %v169, %v702
    %v843 = vadd.f32 %v170, %v705
    %v844 = vadd.f32 %v171, %v710
    %v845 = vadd.f32 %v172, %v713
    %v846 = vadd.f32 %v173, %v718
    %v847 = vadd.f32 %v174, %v721
    %v848 = vadd.f32 %v175, %v726
    %v849 = vadd.f32 %v176, %v729
    %v850 = vadd.f32 %v177, %v734
    %v851 = vadd.f32 %v178, %v737
    %v852 = vadd.f32 %v179, %v742
    %v853 = vadd.f32 %v180, %v745
    %v854 = vadd.f32 %v181, %v750
    %v855 = vadd.f32 %v182, %v753
    %v856 = vadd.f32 %v183, %v758
    %v857 = vadd.f32 %v184, %v761
    %v858 = vadd.f32 %v185, %v766
    %v859 = vadd.f32 %v186, %v769
    %v860 = vadd.f32 %v187, %v774
    %v861 = vadd.f32 %v188, %v777
    %v862 = vadd.f32 %v189, %v782
    %v863 = vadd.f32 %v190, %v785
    %v864 = vadd.f32 %v191, %v790
    %v865 = vadd.f32 %v192, %v793
    %v866 = vadd.f32 %v193, %v798
    %v867 = vadd.f32 %v194, %v801
    %868 = vst [vmem:[#allocation2] sm:$0xff] %v804
    %869 = vst [vmem:[#allocation2 + $0x8] sm:$0xff] %v805
    %870 = vst [vmem:[#allocation2 + $0x10] sm:$0xff] %v806
    %871 = vst [vmem:[#allocation2 + $0x18] sm:$0xff] %v807
    %872 = vst [vmem:[#allocation2 + $0x20] sm:$0xff] %v808
    %873 = vst [vmem:[#allocation2 + $0x28] sm:$0xff] %v809
    %874 = vst [vmem:[#allocation2 + $0x30] sm:$0xff] %v810
    %875 = vst [vmem:[#allocation2 + $0x38] sm:$0xff] %v811
    %876 = vst [vmem:[#allocation2 + $0x40] sm:$0xff] %v812
    %877 = vst [vmem:[#allocation2 + $0x48] sm:$0xff] %v813
    %878 = vst [vmem:[#allocation2 + $0x50] sm:$0xff] %v814
    %879 = vst [vmem:[#allocation2 + $0x58] sm:$0xff] %v815
    %880 = vst [vmem:[#allocation2 + $0x60] sm:$0xff] %v816
    %881 = vst [vmem:[#allocation2 + $0x68] sm:$0xff] %v817
    %882 = vst [vmem:[#allocation2 + $0x70] sm:$0xff] %v818
    %883 = vst [vmem:[#allocation2 + $0x78] sm:$0xff] %v819
    %884 = vst [vmem:[#allocation2 + $0x80] sm:$0xff] %v820
    %885 = vst [vmem:[#allocation2 + $0x88] sm:$0xff] %v821
    %886 = vst [vmem:[#allocation2 + $0x90] sm:$0xff] %v822
    %887 = vst [vmem:[#allocation2 + $0x98] sm:$0xff] %v823
    %888 = vst [vmem:[#allocation2 + $0xa0] sm:$0xff] %v824
    %889 = vst [vmem:[#allocation2 + $0xa8] sm:$0xff] %v825
    %890 = vst [vmem:[#allocation2 + $0xb0] sm:$0xff] %v826
    %891 = vst [vmem:[#allocation2 + $0xb8] sm:$0xff] %v827
    %892 = vst [vmem:[#allocation2 + $0xc0] sm:$0xff] %v828
    %893 = vst [vmem:[#allocation2 + $0xc8] sm:$0xff] %v829
    %894 = vst [vmem:[#allocation2 + $0xd0] sm:$0xff] %v830
    %895 = vst [vmem:[#allocation2 + $0xd8] sm:$0xff] %v831
    %896 = vst [vmem:[#allocation2 + $0xe0] sm:$0xff] %v832
    %897 = vst [vmem:[#allocation2 + $0xe8] sm:$0xff] %v833
    %898 = vst [vmem:[#allocation2 + $0xf0] sm:$0xff] %v834
    %899 = vst [vmem:[#allocation2 + $0xf8] sm:$0xff] %v835
    %900 = vst [vmem:[#allocation2 + $0x100] sm:$0xff] %v836
    %901 = vst [vmem:[#allocation2 + $0x108] sm:$0xff] %v837
    %902 = vst [vmem:[#allocation2 + $0x110] sm:$0xff] %v838
    %903 = vst [vmem:[#allocation2 + $0x118] sm:$0xff] %v839
    %904 = vst [vmem:[#allocation2 + $0x120] sm:$0xff] %v840
    %905 = vst [vmem:[#allocation2 + $0x128] sm:$0xff] %v841
    %906 = vst [vmem:[#allocation2 + $0x130] sm:$0xff] %v842
    %907 = vst [vmem:[#allocation2 + $0x138] sm:$0xff] %v843
    %908 = vst [vmem:[#allocation2 + $0x140] sm:$0xff] %v844
    %909 = vst [vmem:[#allocation2 + $0x148] sm:$0xff] %v845
    %910 = vst [vmem:[#allocation2 + $0x150] sm:$0xff] %v846
    %911 = vst [vmem:[#allocation2 + $0x158] sm:$0xff] %v847
    %912 = vst [vmem:[#allocation2 + $0x160] sm:$0xff] %v848
    %913 = vst [vmem:[#allocation2 + $0x168] sm:$0xff] %v849
    %914 = vst [vmem:[#allocation2 + $0x170] sm:$0xff] %v850
    %915 = vst [vmem:[#allocation2 + $0x178] sm:$0xff] %v851
    %916 = vst [vmem:[#allocation2 + $0x180] sm:$0xff] %v852
    %917 = vst [vmem:[#allocation2 + $0x188] sm:$0xff] %v853
    %918 = vst [vmem:[#allocation2 + $0x190] sm:$0xff] %v854
    %919 = vst [vmem:[#allocation2 + $0x198] sm:$0xff] %v855
    %920 = vst [vmem:[#allocation2 + $0x1a0] sm:$0xff] %v856
    %921 = vst [vmem:[#allocation2 + $0x1a8] sm:$0xff] %v857
    %922 = vst [vmem:[#allocation2 + $0x1b0] sm:$0xff] %v858
    %923 = vst [vmem:[#allocation2 + $0x1b8] sm:$0xff] %v859
    %924 = vst [vmem:[#allocation2 + $0x1c0] sm:$0xff] %v860
    %925 = vst [vmem:[#allocation2 + $0x1c8] sm:$0xff] %v861
    %926 = vst [vmem:[#allocation2 + $0x1d0] sm:$0xff] %v862
    %927 = vst [vmem:[#allocation2 + $0x1d8] sm:$0xff] %v863
    %928 = vst [vmem:[#allocation2 + $0x1e0] sm:$0xff] %v864
    %929 = vst [vmem:[#allocation2 + $0x1e8] sm:$0xff] %v865
    %930 = vst [vmem:[#allocation2 + $0x1f0] sm:$0xff] %v866
    %931 = vst [vmem:[#allocation2 + $0x1f8] sm:$0xff] %v867
    // Predicated region
    $region38: #{tpu_custom_call.1} parent=1 // pred_check
      %p932 = pneg %p63
    $region39: #{tpu_custom_call.1} parent=1 // pred_check_branch
      %934 = sbr.rel (%p932) target = $region41
    $region40: #{tpu_custom_call.1} parent=1 // pred_region
      %v935 = vld [vmem:[#allocation2] sm:$0xff]
      %v936 = vld [vmem:[#allocation2 + $0x8] sm:$0xff]
      %v937 = vld [vmem:[#allocation2 + $0x10] sm:$0xff]
      %v938 = vld [vmem:[#allocation2 + $0x18] sm:$0xff]
      %v939 = vld [vmem:[#allocation2 + $0x20] sm:$0xff]
      %v940 = vld [vmem:[#allocation2 + $0x28] sm:$0xff]
      %v941 = vld [vmem:[#allocation2 + $0x30] sm:$0xff]
      %v942 = vld [vmem:[#allocation2 + $0x38] sm:$0xff]
      %v943 = vld [vmem:[#allocation2 + $0x40] sm:$0xff]
      %v944 = vld [vmem:[#allocation2 + $0x48] sm:$0xff]
      %v945 = vld [vmem:[#allocation2 + $0x50] sm:$0xff]
      %v946 = vld [vmem:[#allocation2 + $0x58] sm:$0xff]
      %v947 = vld [vmem:[#allocation2 + $0x60] sm:$0xff]
      %v948 = vld [vmem:[#allocation2 + $0x68] sm:$0xff]
      %v949 = vld [vmem:[#allocation2 + $0x70] sm:$0xff]
      %v950 = vld [vmem:[#allocation2 + $0x78] sm:$0xff]
      %v951 = vld [vmem:[#allocation2 + $0x80] sm:$0xff]
      %v952 = vld [vmem:[#allocation2 + $0x88] sm:$0xff]
      %v953 = vld [vmem:[#allocation2 + $0x90] sm:$0xff]
      %v954 = vld [vmem:[#allocation2 + $0x98] sm:$0xff]
      %v955 = vld [vmem:[#allocation2 + $0xa0] sm:$0xff]
      %v956 = vld [vmem:[#allocation2 + $0xa8] sm:$0xff]
      %v957 = vld [vmem:[#allocation2 + $0xb0] sm:$0xff]
      %v958 = vld [vmem:[#allocation2 + $0xb8] sm:$0xff]
      %v959 = vld [vmem:[#allocation2 + $0xc0] sm:$0xff]
      %v960 = vld [vmem:[#allocation2 + $0xc8] sm:$0xff]
      %v961 = vld [vmem:[#allocation2 + $0xd0] sm:$0xff]
      %v962 = vld [vmem:[#allocation2 + $0xd8] sm:$0xff]
      %v963 = vld [vmem:[#allocation2 + $0xe0] sm:$0xff]
      %v964 = vld [vmem:[#allocation2 + $0xe8] sm:$0xff]
      %v965 = vld [vmem:[#allocation2 + $0xf0] sm:$0xff]
      %v966 = vld [vmem:[#allocation2 + $0xf8] sm:$0xff]
      %v967 = vld [vmem:[#allocation2 + $0x100] sm:$0xff]
      %v968 = vld [vmem:[#allocation2 + $0x108] sm:$0xff]
      %v969 = vld [vmem:[#allocation2 + $0x110] sm:$0xff]
      %v970 = vld [vmem:[#allocation2 + $0x118] sm:$0xff]
      %v971 = vld [vmem:[#allocation2 + $0x120] sm:$0xff]
      %v972 = vld [vmem:[#allocation2 + $0x128] sm:$0xff]
      %v973 = vld [vmem:[#allocation2 + $0x130] sm:$0xff]
      %v974 = vld [vmem:[#allocation2 + $0x138] sm:$0xff]
      %v975 = vld [vmem:[#allocation2 + $0x140] sm:$0xff]
      %v976 = vld [vmem:[#allocation2 + $0x148] sm:$0xff]
      %v977 = vld [vmem:[#allocation2 + $0x150] sm:$0xff]
      %v978 = vld [vmem:[#allocation2 + $0x158] sm:$0xff]
      %v979 = vld [vmem:[#allocation2 + $0x160] sm:$0xff]
      %v980 = vld [vmem:[#allocation2 + $0x168] sm:$0xff]
      %v981 = vld [vmem:[#allocation2 + $0x170] sm:$0xff]
      %v982 = vld [vmem:[#allocation2 + $0x178] sm:$0xff]
      %v983 = vld [vmem:[#allocation2 + $0x180] sm:$0xff]
      %v984 = vld [vmem:[#allocation2 + $0x188] sm:$0xff]
      %v985 = vld [vmem:[#allocation2 + $0x190] sm:$0xff]
      %v986 = vld [vmem:[#allocation2 + $0x198] sm:$0xff]
      %v987 = vld [vmem:[#allocation2 + $0x1a0] sm:$0xff]
      %v988 = vld [vmem:[#allocation2 + $0x1a8] sm:$0xff]
      %v989 = vld [vmem:[#allocation2 + $0x1b0] sm:$0xff]
      %v990 = vld [vmem:[#allocation2 + $0x1b8] sm:$0xff]
      %v991 = vld [vmem:[#allocation2 + $0x1c0] sm:$0xff]
      %v992 = vld [vmem:[#allocation2 + $0x1c8] sm:$0xff]
      %v993 = vld [vmem:[#allocation2 + $0x1d0] sm:$0xff]
      %v994 = vld [vmem:[#allocation2 + $0x1d8] sm:$0xff]
      %v995 = vld [vmem:[#allocation2 + $0x1e0] sm:$0xff]
      %v996 = vld [vmem:[#allocation2 + $0x1e8] sm:$0xff]
      %v997 = vld [vmem:[#allocation2 + $0x1f0] sm:$0xff]
      %v998 = vld [vmem:[#allocation2 + $0x1f8] sm:$0xff]
      %v999 = vld [vmem:[%s2] sm:$0x1]
      %v1001 = vlaneseq
      %v1002 = vshrl.u32 %v1001, 7
      %v1003 = vsub.s32 0, %v1002
      %v1004 = vrot.slane %v999, %v1003
      %v1006 = vadd.f32 %v935, %v1004
      %v1007 = vadd.f32 %v936, %v1004
      %v1008 = vadd.f32 %v937, %v1004
      %v1009 = vadd.f32 %v938, %v1004
      %v1010 = vadd.f32 %v939, %v1004
      %v1011 = vadd.f32 %v940, %v1004
      %v1012 = vadd.f32 %v941, %v1004
      %v1013 = vadd.f32 %v942, %v1004
      %v1014 = vadd.f32 %v943, %v1004
      %v1015 = vadd.f32 %v944, %v1004
      %v1016 = vadd.f32 %v945, %v1004
      %v1017 = vadd.f32 %v946, %v1004
      %v1018 = vadd.f32 %v947, %v1004
      %v1019 = vadd.f32 %v948, %v1004
      %v1020 = vadd.f32 %v949, %v1004
      %v1021 = vadd.f32 %v950, %v1004
      %v1022 = vadd.f32 %v951, %v1004
      %v1023 = vadd.f32 %v952, %v1004
      %v1024 = vadd.f32 %v953, %v1004
      %v1025 = vadd.f32 %v954, %v1004
      %v1026 = vadd.f32 %v955, %v1004
      %v1027 = vadd.f32 %v956, %v1004
      %v1028 = vadd.f32 %v957, %v1004
      %v1029 = vadd.f32 %v958, %v1004
      %v1030 = vadd.f32 %v959, %v1004
      %v1031 = vadd.f32 %v960, %v1004
      %v1032 = vadd.f32 %v961, %v1004
      %v1033 = vadd.f32 %v962, %v1004
      %v1034 = vadd.f32 %v963, %v1004
      %v1035 = vadd.f32 %v964, %v1004
      %v1036 = vadd.f32 %v965, %v1004
      %v1037 = vadd.f32 %v966, %v1004
      %v1038 = vadd.f32 %v967, %v1004
      %v1039 = vadd.f32 %v968, %v1004
      %v1040 = vadd.f32 %v969, %v1004
      %v1041 = vadd.f32 %v970, %v1004
      %v1042 = vadd.f32 %v971, %v1004
      %v1043 = vadd.f32 %v972, %v1004
      %v1044 = vadd.f32 %v973, %v1004
      %v1045 = vadd.f32 %v974, %v1004
      %v1046 = vadd.f32 %v975, %v1004
      %v1047 = vadd.f32 %v976, %v1004
      %v1048 = vadd.f32 %v977, %v1004
      %v1049 = vadd.f32 %v978, %v1004
      %v1050 = vadd.f32 %v979, %v1004
      %v1051 = vadd.f32 %v980, %v1004
      %v1052 = vadd.f32 %v981, %v1004
      %v1053 = vadd.f32 %v982, %v1004
      %v1054 = vadd.f32 %v983, %v1004
      %v1055 = vadd.f32 %v984, %v1004
      %v1056 = vadd.f32 %v985, %v1004
      %v1057 = vadd.f32 %v986, %v1004
      %v1058 = vadd.f32 %v987, %v1004
      %v1059 = vadd.f32 %v988, %v1004
      %v1060 = vadd.f32 %v989, %v1004
      %v1061 = vadd.f32 %v990, %v1004
      %v1062 = vadd.f32 %v991, %v1004
      %v1063 = vadd.f32 %v992, %v1004
      %v1064 = vadd.f32 %v993, %v1004
      %v1065 = vadd.f32 %v994, %v1004
      %v1066 = vadd.f32 %v995, %v1004
      %v1067 = vadd.f32 %v996, %v1004
      %v1068 = vadd.f32 %v997, %v1004
      %v1069 = vadd.f32 %v998, %v1004
      %v1070 = vmax.f32 %v1006, 0.0
      %v1071 = vmax.f32 %v1007, 0.0
      %v1072 = vmax.f32 %v1008, 0.0
      %v1073 = vmax.f32 %v1009, 0.0
      %v1074 = vmax.f32 %v1010, 0.0
      %v1075 = vmax.f32 %v1011, 0.0
      %v1076 = vmax.f32 %v1012, 0.0
      %v1077 = vmax.f32 %v1013, 0.0
      %v1078 = vmax.f32 %v1014, 0.0
      %v1079 = vmax.f32 %v1015, 0.0
      %v1080 = vmax.f32 %v1016, 0.0
      %v1081 = vmax.f32 %v1017, 0.0
      %v1082 = vmax.f32 %v1018, 0.0
      %v1083 = vmax.f32 %v1019, 0.0
      %v1084 = vmax.f32 %v1020, 0.0
      %v1085 = vmax.f32 %v1021, 0.0
      %v1086 = vmax.f32 %v1022, 0.0
      %v1087 = vmax.f32 %v1023, 0.0
      %v1088 = vmax.f32 %v1024, 0.0
      %v1089 = vmax.f32 %v1025, 0.0
      %v1090 = vmax.f32 %v1026, 0.0
      %v1091 = vmax.f32 %v1027, 0.0
      %v1092 = vmax.f32 %v1028, 0.0
      %v1093 = vmax.f32 %v1029, 0.0
      %v1094 = vmax.f32 %v1030, 0.0
      %v1095 = vmax.f32 %v1031, 0.0
      %v1096 = vmax.f32 %v1032, 0.0
      %v1097 = vmax.f32 %v1033, 0.0
      %v1098 = vmax.f32 %v1034, 0.0
      %v1099 = vmax.f32 %v1035, 0.0
      %v1100 = vmax.f32 %v1036, 0.0
      %v1101 = vmax.f32 %v1037, 0.0
      %v1102 = vmax.f32 %v1038, 0.0
      %v1103 = vmax.f32 %v1039, 0.0
      %v1104 = vmax.f32 %v1040, 0.0
      %v1105 = vmax.f32 %v1041, 0.0
      %v1106 = vmax.f32 %v1042, 0.0
      %v1107 = vmax.f32 %v1043, 0.0
      %v1108 = vmax.f32 %v1044, 0.0
      %v1109 = vmax.f32 %v1045, 0.0
      %v1110 = vmax.f32 %v1046, 0.0
      %v1111 = vmax.f32 %v1047, 0.0
      %v1112 = vmax.f32 %v1048, 0.0
      %v1113 = vmax.f32 %v1049, 0.0
      %v1114 = vmax.f32 %v1050, 0.0
      %v1115 = vmax.f32 %v1051, 0.0
      %v1116 = vmax.f32 %v1052, 0.0
      %v1117 = vmax.f32 %v1053, 0.0
      %v1118 = vmax.f32 %v1054, 0.0
      %v1119 = vmax.f32 %v1055, 0.0
      %v1120 = vmax.f32 %v1056, 0.0
      %v1121 = vmax.f32 %v1057, 0.0
      %v1122 = vmax.f32 %v1058, 0.0
      %v1123 = vmax.f32 %v1059, 0.0
      %v1124 = vmax.f32 %v1060, 0.0
      %v1125 = vmax.f32 %v1061, 0.0
      %v1126 = vmax.f32 %v1062, 0.0
      %v1127 = vmax.f32 %v1063, 0.0
      %v1128 = vmax.f32 %v1064, 0.0
      %v1129 = vmax.f32 %v1065, 0.0
      %v1130 = vmax.f32 %v1066, 0.0
      %v1131 = vmax.f32 %v1067, 0.0
      %v1132 = vmax.f32 %v1068, 0.0
      %v1133 = vmax.f32 %v1069, 0.0
      %v1134 = vpack.c.bf16 %v1071, %v1070
      %v1135 = vpack.c.bf16 %v1073, %v1072
      %v1136 = vpack.c.bf16 %v1075, %v1074
      %v1137 = vpack.c.bf16 %v1077, %v1076
      %v1138 = vpack.c.bf16 %v1079, %v1078
      %v1139 = vpack.c.bf16 %v1081, %v1080
      %v1140 = vpack.c.bf16 %v1083, %v1082
      %v1141 = vpack.c.bf16 %v1085, %v1084
      %v1142 = vpack.c.bf16 %v1087, %v1086
      %v1143 = vpack.c.bf16 %v1089, %v1088
      %v1144 = vpack.c.bf16 %v1091, %v1090
      %v1145 = vpack.c.bf16 %v1093, %v1092
      %v1146 = vpack.c.bf16 %v1095, %v1094
      %v1147 = vpack.c.bf16 %v1097, %v1096
      %v1148 = vpack.c.bf16 %v1099, %v1098
      %v1149 = vpack.c.bf16 %v1101, %v1100
      %v1150 = vpack.c.bf16 %v1103, %v1102
      %v1151 = vpack.c.bf16 %v1105, %v1104
      %v1152 = vpack.c.bf16 %v1107, %v1106
      %v1153 = vpack.c.bf16 %v1109, %v1108
      %v1154 = vpack.c.bf16 %v1111, %v1110
      %v1155 = vpack.c.bf16 %v1113, %v1112
      %v1156 = vpack.c.bf16 %v1115, %v1114
      %v1157 = vpack.c.bf16 %v1117, %v1116
      %v1158 = vpack.c.bf16 %v1119, %v1118
      %v1159 = vpack.c.bf16 %v1121, %v1120
      %v1160 = vpack.c.bf16 %v1123, %v1122
      %v1161 = vpack.c.bf16 %v1125, %v1124
      %v1162 = vpack.c.bf16 %v1127, %v1126
      %v1163 = vpack.c.bf16 %v1129, %v1128
      %v1164 = vpack.c.bf16 %v1131, %v1130
      %v1165 = vpack.c.bf16 %v1133, %v1132
      %v1166 = vld [vmem:[#allocation8] sm:$0xf]
      %v1167 = vld [vmem:[#allocation8 + $0x4] sm:$0xf]
      %v1168 = vld [vmem:[#allocation8 + $0x8] sm:$0xf]
      %v1169 = vld [vmem:[#allocation8 + $0xc] sm:$0xf]
      %v1170 = vld [vmem:[#allocation8 + $0x10] sm:$0xf]
      %v1171 = vld [vmem:[#allocation8 + $0x14] sm:$0xf]
      %v1172 = vld [vmem:[#allocation8 + $0x18] sm:$0xf]
      %v1173 = vld [vmem:[#allocation8 + $0x1c] sm:$0xf]
      %v1174 = vld [vmem:[#allocation8 + $0x20] sm:$0xf]
      %v1175 = vld [vmem:[#allocation8 + $0x24] sm:$0xf]
      %v1176 = vld [vmem:[#allocation8 + $0x28] sm:$0xf]
      %v1177 = vld [vmem:[#allocation8 + $0x2c] sm:$0xf]
      %v1178 = vld [vmem:[#allocation8 + $0x30] sm:$0xf]
      %v1179 = vld [vmem:[#allocation8 + $0x34] sm:$0xf]
      %v1180 = vld [vmem:[#allocation8 + $0x38] sm:$0xf]
      %v1181 = vld [vmem:[#allocation8 + $0x3c] sm:$0xf]
      %v1182 = vld [vmem:[%s4] sm:$0x1]
      %v1184 = vlaneseq
      %v1185 = vshrl.u32 %v1184, 7
      %v1186 = vsub.s32 0, %v1185
      %v1187 = vrot.slane %v1182, %v1186
      %v1205 = vunpack.c.l.b16 %v1166
      %v1206 = vunpack.c.l.b16 %v1167
      %v1207 = vunpack.c.l.b16 %v1168
      %v1208 = vunpack.c.l.b16 %v1169
      %v1209 = vunpack.c.l.b16 %v1170
      %v1210 = vunpack.c.l.b16 %v1171
      %v1211 = vunpack.c.l.b16 %v1172
      %v1212 = vunpack.c.l.b16 %v1173
      %v1213 = vunpack.c.l.b16 %v1174
      %v1214 = vunpack.c.l.b16 %v1175
      %v1215 = vunpack.c.l.b16 %v1176
      %v1216 = vunpack.c.l.b16 %v1177
      %v1217 = vunpack.c.l.b16 %v1178
      %v1218 = vunpack.c.l.b16 %v1179
      %v1219 = vunpack.c.l.b16 %v1180
      %v1220 = vunpack.c.l.b16 %v1181
      %v1221 = vpack.c.b16 %v1206, %v1205
      %v1222 = vpack.c.b16 %v1208, %v1207
      %v1223 = vpack.c.b16 %v1210, %v1209
      %v1224 = vpack.c.b16 %v1212, %v1211
      %v1225 = vpack.c.b16 %v1214, %v1213
      %v1226 = vpack.c.b16 %v1216, %v1215
      %v1227 = vpack.c.b16 %v1218, %v1217
      %v1228 = vpack.c.b16 %v1220, %v1219
      %1237 = vmatprep.subr.bf16.mxu0 0
      %1238 = vmatpush1.bf16.msra.mxu0 %v1221
      %1239 = vmatprep.subr.bf16.mxu0 0
      %1240 = vmatpush1.bf16.msra.mxu0 %v1222
      %1241 = vmatprep.subr.bf16.mxu0 0
      %1242 = vmatpush1.bf16.msra.mxu0 %v1223
      %1243 = vmatprep.subr.bf16.mxu0 0
      %1244 = vmatpush1.bf16.msra.mxu0 %v1224
      %1245 = vmatprep.subr.bf16.mxu0 0
      %1246 = vmatpush1.bf16.msra.mxu0 %v1225
      %1247 = vmatprep.subr.bf16.mxu0 0
      %1248 = vmatpush1.bf16.msra.mxu0 %v1226
      %1249 = vmatprep.subr.bf16.mxu0 0
      %1250 = vmatpush1.bf16.msra.mxu0 %v1227
      %1251 = vmatprep.subr.bf16.mxu0 0
      %1252 = vmatpush1.bf16.msra.mxu0 %v1228
      %1253 = vmatprep.subr.bf16.mxu0 0
      %1254 = vmatpush1.bf16.msra.mxu0 0
      %1255 = vmatprep.subr.bf16.mxu0 0
      %1256 = vmatpush1.bf16.msra.mxu0 0
      %1257 = vmatprep.subr.bf16.mxu0 0
      %1258 = vmatpush1.bf16.msra.mxu0 0
      %1259 = vmatprep.subr.bf16.mxu0 0
      %1260 = vmatpush1.bf16.msra.mxu0 0
      %1261 = vmatprep.subr.bf16.mxu0 0
      %1262 = vmatpush1.bf16.msra.mxu0 0
      %1263 = vmatprep.subr.bf16.mxu0 0
      %1264 = vmatpush1.bf16.msra.mxu0 0
      %1265 = vmatprep.subr.bf16.mxu0 0
      %1266 = vmatpush1.bf16.msra.mxu0 0
      %1267 = vmatprep.subr.bf16.mxu0 0
      %1268 = vmatpush1.bf16.msra.mxu0 0
      %1269 = vmatprep.mubr.bf16.mxu0 0
      %1270 = vmatmul.mubr.bf16.gmra.mrb[0].mxu0 %v1134
      %v1271 = vpop.f32.mrb[0].mxu0
      %v1272 = vadd.f32 %v1187, %v1271
      %v1273 = vpop.f32.mrb[0].mxu0
      %v1274 = vpop.f32.mrb[0].mxu0
      %v1275 = vadd.f32 %v1187, %v1274
      %v1276 = vpop.f32.mrb[0].mxu0
      %1277 = vmatprep.mubr.bf16.mxu0 0
      %1278 = vmatmul.mubr.bf16.gmra.mrb[0].mxu0 %v1135
      %v1279 = vpop.f32.mrb[0].mxu0
      %v1280 = vadd.f32 %v1187, %v1279
      %v1281 = vpop.f32.mrb[0].mxu0
      %v1282 = vpop.f32.mrb[0].mxu0
      %v1283 = vadd.f32 %v1187, %v1282
      %v1284 = vpop.f32.mrb[0].mxu0
      %1285 = vmatprep.mubr.bf16.mxu0 0
      %1286 = vmatmul.mubr.bf16.gmra.mrb[0].mxu0 %v1136
      %v1287 = vpop.f32.mrb[0].mxu0
      %v1288 = vadd.f32 %v1187, %v1287
      %v1289 = vpop.f32.mrb[0].mxu0
      %v1290 = vpop.f32.mrb[0].mxu0
      %v1291 = vadd.f32 %v1187, %v1290
      %v1292 = vpop.f32.mrb[0].mxu0
      %1293 = vmatprep.mubr.bf16.mxu0 0
      %1294 = vmatmul.mubr.bf16.gmra.mrb[0].mxu0 %v1137
      %v1295 = vpop.f32.mrb[0].mxu0
      %v1296 = vadd.f32 %v1187, %v1295
      %v1297 = vpop.f32.mrb[0].mxu0
      %v1298 = vpop.f32.mrb[0].mxu0
      %v1299 = vadd.f32 %v1187, %v1298
      %v1300 = vpop.f32.mrb[0].mxu0
      %1301 = vmatprep.mubr.bf16.mxu0 0
      %1302 = vmatmul.mubr.bf16.gmra.mrb[0].mxu0 %v1138
      %v1303 = vpop.f32.mrb[0].mxu0
      %v1304 = vadd.f32 %v1187, %v1303
      %v1305 = vpop.f32.mrb[0].mxu0
      %v1306 = vpop.f32.mrb[0].mxu0
      %v1307 = vadd.f32 %v1187, %v1306
      %v1308 = vpop.f32.mrb[0].mxu0
      %1309 = vmatprep.mubr.bf16.mxu0 0
      %1310 = vmatmul.mubr.bf16.gmra.mrb[0].mxu0 %v1139
      %v1311 = vpop.f32.mrb[0].mxu0
      %v1312 = vadd.f32 %v1187, %v1311
      %v1313 = vpop.f32.mrb[0].mxu0
      %v1314 = vpop.f32.mrb[0].mxu0
      %v1315 = vadd.f32 %v1187, %v1314
      %v1316 = vpop.f32.mrb[0].mxu0
      %1317 = vmatprep.mubr.bf16.mxu0 0
      %1318 = vmatmul.mubr.bf16.gmra.mrb[0].mxu0 %v1140
      %v1319 = vpop.f32.mrb[0].mxu0
      %v1320 = vadd.f32 %v1187, %v1319
      %v1321 = vpop.f32.mrb[0].mxu0
      %v1322 = vpop.f32.mrb[0].mxu0
      %v1323 = vadd.f32 %v1187, %v1322
      %v1324 = vpop.f32.mrb[0].mxu0
      %1325 = vmatprep.mubr.bf16.mxu0 0
      %1326 = vmatmul.mubr.bf16.gmra.mrb[0].mxu0 %v1141
      %v1327 = vpop.f32.mrb[0].mxu0
      %v1328 = vadd.f32 %v1187, %v1327
      %v1329 = vpop.f32.mrb[0].mxu0
      %v1330 = vpop.f32.mrb[0].mxu0
      %v1331 = vadd.f32 %v1187, %v1330
      %v1332 = vpop.f32.mrb[0].mxu0
      %1333 = vmatprep.mubr.bf16.mxu0 0
      %1334 = vmatmul.mubr.bf16.gmra.mrb[0].mxu0 %v1142
      %v1335 = vpop.f32.mrb[0].mxu0
      %v1336 = vadd.f32 %v1187, %v1335
      %v1337 = vpop.f32.mrb[0].mxu0
      %v1338 = vpop.f32.mrb[0].mxu0
      %v1339 = vadd.f32 %v1187, %v1338
      %v1340 = vpop.f32.mrb[0].mxu0
      %1341 = vmatprep.mubr.bf16.mxu0 0
      %1342 = vmatmul.mubr.bf16.gmra.mrb[0].mxu0 %v1143
      %v1343 = vpop.f32.mrb[0].mxu0
      %v1344 = vadd.f32 %v1187, %v1343
      %v1345 = vpop.f32.mrb[0].mxu0
      %v1346 = vpop.f32.mrb[0].mxu0
      %v1347 = vadd.f32 %v1187, %v1346
      %v1348 = vpop.f32.mrb[0].mxu0
      %1349 = vmatprep.mubr.bf16.mxu0 0
      %1350 = vmatmul.mubr.bf16.gmra.mrb[0].mxu0 %v1144
      %v1351 = vpop.f32.mrb[0].mxu0
      %v1352 = vadd.f32 %v1187, %v1351
      %v1353 = vpop.f32.mrb[0].mxu0
      %v1354 = vpop.f32.mrb[0].mxu0
      %v1355 = vadd.f32 %v1187, %v1354
      %v1356 = vpop.f32.mrb[0].mxu0
      %1357 = vmatprep.mubr.bf16.mxu0 0
      %1358 = vmatmul.mubr.bf16.gmra.mrb[0].mxu0 %v1145
      %v1359 = vpop.f32.mrb[0].mxu0
      %v1360 = vadd.f32 %v1187, %v1359
      %v1361 = vpop.f32.mrb[0].mxu0
      %v1362 = vpop.f32.mrb[0].mxu0
      %v1363 = vadd.f32 %v1187, %v1362
      %v1364 = vpop.f32.mrb[0].mxu0
      %1365 = vmatprep.mubr.bf16.mxu0 0
      %1366 = vmatmul.mubr.bf16.gmra.mrb[0].mxu0 %v1146
      %v1367 = vpop.f32.mrb[0].mxu0
      %v1368 = vadd.f32 %v1187, %v1367
      %v1369 = vpop.f32.mrb[0].mxu0
      %v1370 = vpop.f32.mrb[0].mxu0
      %v1371 = vadd.f32 %v1187, %v1370
      %v1372 = vpop.f32.mrb[0].mxu0
      %1373 = vmatprep.mubr.bf16.mxu0 0
      %1374 = vmatmul.mubr.bf16.gmra.mrb[0].mxu0 %v1147
      %v1375 = vpop.f32.mrb[0].mxu0
      %v1376 = vadd.f32 %v1187, %v1375
      %v1377 = vpop.f32.mrb[0].mxu0
      %v1378 = vpop.f32.mrb[0].mxu0
      %v1379 = vadd.f32 %v1187, %v1378
      %v1380 = vpop.f32.mrb[0].mxu0
      %1381 = vmatprep.mubr.bf16.mxu0 0
      %1382 = vmatmul.mubr.bf16.gmra.mrb[0].mxu0 %v1148
      %v1383 = vpop.f32.mrb[0].mxu0
      %v1384 = vadd.f32 %v1187, %v1383
      %v1385 = vpop.f32.mrb[0].mxu0
      %v1386 = vpop.f32.mrb[0].mxu0
      %v1387 = vadd.f32 %v1187, %v1386
      %v1388 = vpop.f32.mrb[0].mxu0
      %1389 = vmatprep.mubr.bf16.mxu0 0
      %1390 = vmatmul.mubr.bf16.gmra.mrb[0].mxu0 %v1149
      %v1391 = vpop.f32.mrb[0].mxu0
      %v1392 = vadd.f32 %v1187, %v1391
      %v1393 = vpop.f32.mrb[0].mxu0
      %v1394 = vpop.f32.mrb[0].mxu0
      %v1395 = vadd.f32 %v1187, %v1394
      %v1396 = vpop.f32.mrb[0].mxu0
      %1397 = vmatprep.mubr.bf16.mxu0 0
      %1398 = vmatmul.mubr.bf16.gmra.mrb[0].mxu0 %v1150
      %v1399 = vpop.f32.mrb[0].mxu0
      %v1400 = vadd.f32 %v1187, %v1399
      %v1401 = vpop.f32.mrb[0].mxu0
      %v1402 = vpop.f32.mrb[0].mxu0
      %v1403 = vadd.f32 %v1187, %v1402
      %v1404 = vpop.f32.mrb[0].mxu0
      %1405 = vmatprep.mubr.bf16.mxu0 0
      %1406 = vmatmul.mubr.bf16.gmra.mrb[0].mxu0 %v1151
      %v1407 = vpop.f32.mrb[0].mxu0
      %v1408 = vadd.f32 %v1187, %v1407
      %v1409 = vpop.f32.mrb[0].mxu0
      %v1410 = vpop.f32.mrb[0].mxu0
      %v1411 = vadd.f32 %v1187, %v1410
      %v1412 = vpop.f32.mrb[0].mxu0
      %1413 = vmatprep.mubr.bf16.mxu0 0
      %1414 = vmatmul.mubr.bf16.gmra.mrb[0].mxu0 %v1152
      %v1415 = vpop.f32.mrb[0].mxu0
      %v1416 = vadd.f32 %v1187, %v1415
      %v1417 = vpop.f32.mrb[0].mxu0
      %v1418 = vpop.f32.mrb[0].mxu0
      %v1419 = vadd.f32 %v1187, %v1418
      %v1420 = vpop.f32.mrb[0].mxu0
      %1421 = vmatprep.mubr.bf16.mxu0 0
      %1422 = vmatmul.mubr.bf16.gmra.mrb[0].mxu0 %v1153
      %v1423 = vpop.f32.mrb[0].mxu0
      %v1424 = vadd.f32 %v1187, %v1423
      %v1425 = vpop.f32.mrb[0].mxu0
      %v1426 = vpop.f32.mrb[0].mxu0
      %v1427 = vadd.f32 %v1187, %v1426
      %v1428 = vpop.f32.mrb[0].mxu0
      %1429 = vmatprep.mubr.bf16.mxu0 0
      %1430 = vmatmul.mubr.bf16.gmra.mrb[0].mxu0 %v1154
      %v1431 = vpop.f32.mrb[0].mxu0
      %v1432 = vadd.f32 %v1187, %v1431
      %v1433 = vpop.f32.mrb[0].mxu0
      %v1434 = vpop.f32.mrb[0].mxu0
      %v1435 = vadd.f32 %v1187, %v1434
      %v1436 = vpop.f32.mrb[0].mxu0
      %1437 = vmatprep.mubr.bf16.mxu0 0
      %1438 = vmatmul.mubr.bf16.gmra.mrb[0].mxu0 %v1155
      %v1439 = vpop.f32.mrb[0].mxu0
      %v1440 = vadd.f32 %v1187, %v1439
      %v1441 = vpop.f32.mrb[0].mxu0
      %v1442 = vpop.f32.mrb[0].mxu0
      %v1443 = vadd.f32 %v1187, %v1442
      %v1444 = vpop.f32.mrb[0].mxu0
      %1445 = vmatprep.mubr.bf16.mxu0 0
      %1446 = vmatmul.mubr.bf16.gmra.mrb[0].mxu0 %v1156
      %v1447 = vpop.f32.mrb[0].mxu0
      %v1448 = vadd.f32 %v1187, %v1447
      %v1449 = vpop.f32.mrb[0].mxu0
      %v1450 = vpop.f32.mrb[0].mxu0
      %v1451 = vadd.f32 %v1187, %v1450
      %v1452 = vpop.f32.mrb[0].mxu0
      %1453 = vmatprep.mubr.bf16.mxu0 0
      %1454 = vmatmul.mubr.bf16.gmra.mrb[0].mxu0 %v1157
      %v1455 = vpop.f32.mrb[0].mxu0
      %v1456 = vadd.f32 %v1187, %v1455
      %v1457 = vpop.f32.mrb[0].mxu0
      %v1458 = vpop.f32.mrb[0].mxu0
      %v1459 = vadd.f32 %v1187, %v1458
      %v1460 = vpop.f32.mrb[0].mxu0
      %1461 = vmatprep.mubr.bf16.mxu0 0
      %1462 = vmatmul.mubr.bf16.gmra.mrb[0].mxu0 %v1158
      %v1463 = vpop.f32.mrb[0].mxu0
      %v1464 = vadd.f32 %v1187, %v1463
      %v1465 = vpop.f32.mrb[0].mxu0
      %v1466 = vpop.f32.mrb[0].mxu0
      %v1467 = vadd.f32 %v1187, %v1466
      %v1468 = vpop.f32.mrb[0].mxu0
      %1469 = vmatprep.mubr.bf16.mxu0 0
      %1470 = vmatmul.mubr.bf16.gmra.mrb[0].mxu0 %v1159
      %v1471 = vpop.f32.mrb[0].mxu0
      %v1472 = vadd.f32 %v1187, %v1471
      %v1473 = vpop.f32.mrb[0].mxu0
      %v1474 = vpop.f32.mrb[0].mxu0
      %v1475 = vadd.f32 %v1187, %v1474
      %v1476 = vpop.f32.mrb[0].mxu0
      %1477 = vmatprep.mubr.bf16.mxu0 0
      %1478 = vmatmul.mubr.bf16.gmra.mrb[0].mxu0 %v1160
      %v1479 = vpop.f32.mrb[0].mxu0
      %v1480 = vadd.f32 %v1187, %v1479
      %v1481 = vpop.f32.mrb[0].mxu0
      %v1482 = vpop.f32.mrb[0].mxu0
      %v1483 = vadd.f32 %v1187, %v1482
      %v1484 = vpop.f32.mrb[0].mxu0
      %1485 = vmatprep.mubr.bf16.mxu0 0
      %1486 = vmatmul.mubr.bf16.gmra.mrb[0].mxu0 %v1161
      %v1487 = vpop.f32.mrb[0].mxu0
      %v1488 = vadd.f32 %v1187, %v1487
      %v1489 = vpop.f32.mrb[0].mxu0
      %v1490 = vpop.f32.mrb[0].mxu0
      %v1491 = vadd.f32 %v1187, %v1490
      %v1492 = vpop.f32.mrb[0].mxu0
      %1493 = vmatprep.mubr.bf16.mxu0 0
      %1494 = vmatmul.mubr.bf16.gmra.mrb[0].mxu0 %v1162
      %v1495 = vpop.f32.mrb[0].mxu0
      %v1496 = vadd.f32 %v1187, %v1495
      %v1497 = vpop.f32.mrb[0].mxu0
      %v1498 = vpop.f32.mrb[0].mxu0
      %v1499 = vadd.f32 %v1187, %v1498
      %v1500 = vpop.f32.mrb[0].mxu0
      %1501 = vmatprep.mubr.bf16.mxu0 0
      %1502 = vmatmul.mubr.bf16.gmra.mrb[0].mxu0 %v1163
      %v1503 = vpop.f32.mrb[0].mxu0
      %v1504 = vadd.f32 %v1187, %v1503
      %v1505 = vpop.f32.mrb[0].mxu0
      %v1506 = vpop.f32.mrb[0].mxu0
      %v1507 = vadd.f32 %v1187, %v1506
      %v1508 = vpop.f32.mrb[0].mxu0
      %1509 = vmatprep.mubr.bf16.mxu0 0
      %1510 = vmatmul.mubr.bf16.gmra.mrb[0].mxu0 %v1164
      %v1511 = vpop.f32.mrb[0].mxu0
      %v1512 = vadd.f32 %v1187, %v1511
      %v1513 = vpop.f32.mrb[0].mxu0
      %v1514 = vpop.f32.mrb[0].mxu0
      %v1515 = vadd.f32 %v1187, %v1514
      %v1516 = vpop.f32.mrb[0].mxu0
      %1517 = vmatprep.mubr.bf16.mxu0 0
      %1518 = vmatmul.mubr.bf16.gmra.mrb[0].mxu0 %v1165
      %v1519 = vpop.f32.mrb[0].mxu0
      %v1520 = vadd.f32 %v1187, %v1519
      %v1521 = vpop.f32.mrb[0].mxu0
      %v1522 = vpop.f32.mrb[0].mxu0
      %v1523 = vadd.f32 %v1187, %v1522
      %v1524 = vpop.f32.mrb[0].mxu0
      %1525 = vdwg.mxu0
      %1526 = vst [vmem:[#allocation9] sm:$0xff] %v1272
      %1527 = vst [vmem:[#allocation9 + $0x8] sm:$0xff] %v1275
      %1528 = vst [vmem:[#allocation9 + $0x10] sm:$0xff] %v1280
      %1529 = vst [vmem:[#allocation9 + $0x18] sm:$0xff] %v1283
      %1530 = vst [vmem:[#allocation9 + $0x20] sm:$0xff] %v1288
      %1531 = vst [vmem:[#allocation9 + $0x28] sm:$0xff] %v1291
      %1532 = vst [vmem:[#allocation9 + $0x30] sm:$0xff] %v1296
      %1533 = vst [vmem:[#allocation9 + $0x38] sm:$0xff] %v1299
      %1534 = vst [vmem:[#allocation9 + $0x40] sm:$0xff] %v1304
      %1535 = vst [vmem:[#allocation9 + $0x48] sm:$0xff] %v1307
      %1536 = vst [vmem:[#allocation9 + $0x50] sm:$0xff] %v1312
      %1537 = vst [vmem:[#allocation9 + $0x58] sm:$0xff] %v1315
      %1538 = vst [vmem:[#allocation9 + $0x60] sm:$0xff] %v1320
      %1539 = vst [vmem:[#allocation9 + $0x68] sm:$0xff] %v1323
      %1540 = vst [vmem:[#allocation9 + $0x70] sm:$0xff] %v1328
      %1541 = vst [vmem:[#allocation9 + $0x78] sm:$0xff] %v1331
      %1542 = vst [vmem:[#allocation9 + $0x80] sm:$0xff] %v1336
      %1543 = vst [vmem:[#allocation9 + $0x88] sm:$0xff] %v1339
      %1544 = vst [vmem:[#allocation9 + $0x90] sm:$0xff] %v1344
      %1545 = vst [vmem:[#allocation9 + $0x98] sm:$0xff] %v1347
      %1546 = vst [vmem:[#allocation9 + $0xa0] sm:$0xff] %v1352
      %1547 = vst [vmem:[#allocation9 + $0xa8] sm:$0xff] %v1355
      %1548 = vst [vmem:[#allocation9 + $0xb0] sm:$0xff] %v1360
      %1549 = vst [vmem:[#allocation9 + $0xb8] sm:$0xff] %v1363
      %1550 = vst [vmem:[#allocation9 + $0xc0] sm:$0xff] %v1368
      %1551 = vst [vmem:[#allocation9 + $0xc8] sm:$0xff] %v1371
      %1552 = vst [vmem:[#allocation9 + $0xd0] sm:$0xff] %v1376
      %1553 = vst [vmem:[#allocation9 + $0xd8] sm:$0xff] %v1379
      %1554 = vst [vmem:[#allocation9 + $0xe0] sm:$0xff] %v1384
      %1555 = vst [vmem:[#allocation9 + $0xe8] sm:$0xff] %v1387
      %1556 = vst [vmem:[#allocation9 + $0xf0] sm:$0xff] %v1392
      %1557 = vst [vmem:[#allocation9 + $0xf8] sm:$0xff] %v1395
      %1558 = vst [vmem:[#allocation9 + $0x100] sm:$0xff] %v1400
      %1559 = vst [vmem:[#allocation9 + $0x108] sm:$0xff] %v1403
      %1560 = vst [vmem:[#allocation9 + $0x110] sm:$0xff] %v1408
      %1561 = vst [vmem:[#allocation9 + $0x118] sm:$0xff] %v1411
      %1562 = vst [vmem:[#allocation9 + $0x120] sm:$0xff] %v1416
      %1563 = vst [vmem:[#allocation9 + $0x128] sm:$0xff] %v1419
      %1564 = vst [vmem:[#allocation9 + $0x130] sm:$0xff] %v1424
      %1565 = vst [vmem:[#allocation9 + $0x138] sm:$0xff] %v1427
      %1566 = vst [vmem:[#allocation9 + $0x140] sm:$0xff] %v1432
      %1567 = vst [vmem:[#allocation9 + $0x148] sm:$0xff] %v1435
      %1568 = vst [vmem:[#allocation9 + $0x150] sm:$0xff] %v1440
      %1569 = vst [vmem:[#allocation9 + $0x158] sm:$0xff] %v1443
      %1570 = vst [vmem:[#allocation9 + $0x160] sm:$0xff] %v1448
      %1571 = vst [vmem:[#allocation9 + $0x168] sm:$0xff] %v1451
      %1572 = vst [vmem:[#allocation9 + $0x170] sm:$0xff] %v1456
      %1573 = vst [vmem:[#allocation9 + $0x178] sm:$0xff] %v1459
      %1574 = vst [vmem:[#allocation9 + $0x180] sm:$0xff] %v1464
      %1575 = vst [vmem:[#allocation9 + $0x188] sm:$0xff] %v1467
      %1576 = vst [vmem:[#allocation9 + $0x190] sm:$0xff] %v1472
      %1577 = vst [vmem:[#allocation9 + $0x198] sm:$0xff] %v1475
      %1578 = vst [vmem:[#allocation9 + $0x1a0] sm:$0xff] %v1480
      %1579 = vst [vmem:[#allocation9 + $0x1a8] sm:$0xff] %v1483
      %1580 = vst [vmem:[#allocation9 + $0x1b0] sm:$0xff] %v1488
      %1581 = vst [vmem:[#allocation9 + $0x1b8] sm:$0xff] %v1491
      %1582 = vst [vmem:[#allocation9 + $0x1c0] sm:$0xff] %v1496
      %1583 = vst [vmem:[#allocation9 + $0x1c8] sm:$0xff] %v1499
      %1584 = vst [vmem:[#allocation9 + $0x1d0] sm:$0xff] %v1504
      %1585 = vst [vmem:[#allocation9 + $0x1d8] sm:$0xff] %v1507
      %1586 = vst [vmem:[#allocation9 + $0x1e0] sm:$0xff] %v1512
      %1587 = vst [vmem:[#allocation9 + $0x1e8] sm:$0xff] %v1515
      %1588 = vst [vmem:[#allocation9 + $0x1f0] sm:$0xff] %v1520
      %1589 = vst [vmem:[#allocation9 + $0x1f8] sm:$0xff] %v1523
    $region41: #{tpu_custom_call.1} parent=1 // pred_fallthru
      _
    // Predicated region
    $region42: #{tpu_custom_call.1} parent=1 // pred_check
      _
    $region43: #{tpu_custom_call.1} parent=1 // pred_check_branch
      %1591 = sbr.rel (0) target = $region45
    $region44: #{tpu_custom_call.1} parent=1 // pred_region
      %s1593 = ssub.s32 8192, 8192
      %1594 = vsyncadd [#allocation5], %s1593
      %s1595 = sshll.u32 [#allocation9], 4
      %s1596 = int_to_ptr.vmem [resolvable:$true] %s1595
      %1601 = dma.vmem_to_hbm [thread:$0]  %s1596, 8192, %s5, [#allocation5], 128, 128, 8
    $region45: #{tpu_custom_call.1} parent=1 // pred_fallthru
      _
    // Predicated region
    $region46: #{tpu_custom_call.1} parent=1 // pred_check
      _
    $region47: #{tpu_custom_call.1} parent=1 // pred_check_branch
      %1603 = sbr.rel (0) target = $region49
    $region48: #{tpu_custom_call.1} parent=1 // pred_region
      %1604 = dma.done [#allocation5], 8192
    $region49: #{tpu_custom_call.1} parent=1 // pred_fallthru
      _
    %1605 = vsyncpa [#allocation4], 1
    %1606 = vsyncpa [#allocation7], 1
    %1607 = vsyncpa [#allocation5], 1

</llo_original>
